<compile_context>
chip_gen: v7x
topology: tpu7x:2x2x1
jax: 0.10.0
libtpu: 0.0.40
codegen_flags: <defaults>
</compile_context>

<pallas_src>
import jax
import jax.numpy as jnp
from jax import lax
from jax.experimental import pallas as pl
from jax.experimental.pallas import tpu as pltpu

TOTAL_TICKS = 8     # sequence length (TOTAL_TICKS in the PyTorch source)
N_NOTES = 88        # LSTM input size


# ----------------------------------------------------------------------------
# Fused encoder kernel
# ----------------------------------------------------------------------------
def make_encoder_kernel(Bc, T, D, H, L, num_layers):
    """Fused LSTM_Encoder kernel for one batch block of Bc sequences.

    Ref order:
      x_tm   : (T*Bc, D)  bf16, time-major rows (row = t*Bc + b)
      per layer: w_ih (D_in,4H) bf16, w_hh (H,4H) bf16, b (1,4H) f32
      w_head : (T*H, 2L)  bf16, fused [mean | log_var] weight
      b_head : (1, 2L)    f32
      eps    : (Bc, L)    f32 standard-normal noise (replaces self.N.sample)
      z      : (Bc, L)    f32 output latent
      kl     : (1, 1)     f32 partial KL for this batch block
      hflat  : (Bc, T*H)  f32 VMEM scratch (flattened last-layer outputs)
    """

    def kernel(*refs):
        x_ref = refs[0]
        lstm_refs = refs[1:1 + 3 * num_layers]
        w_head_ref = refs[1 + 3 * num_layers]
        b_head_ref = refs[2 + 3 * num_layers]
        eps_ref = refs[3 + 3 * num_layers]
        z_ref = refs[4 + 3 * num_layers]
        kl_ref = refs[5 + 3 * num_layers]
        hflat_ref = refs[6 + 3 * num_layers]

        f32 = jnp.float32
        bf16 = jnp.bfloat16

        # Hoisted weight reads (small).
        wih = [lstm_refs[3 * l][...] for l in range(num_layers)]       # bf16
        whh = [lstm_refs[3 * l + 1][...] for l in range(num_layers)]   # bf16
        bias = [lstm_refs[3 * l + 2][...] for l in range(num_layers)]  # f32

        # Layer-0 input->gate pre-activations for the WHOLE sequence in one MXU
        # push (off the serial recurrence).  Time-major rows, so each per-step
        # slice below is a contiguous, sublane-aligned block (no gathers).
        pre0 = jnp.dot(x_ref[...], wih[0],
                       preferred_element_type=f32) + bias[0]           # (T*Bc, 4H)

        h = [jnp.zeros((Bc, H), f32) for _ in range(num_layers)]
        c = [jnp.zeros((Bc, H), f32) for _ in range(num_layers)]

        # T and num_layers are compile-time constants -> fully unrolled.
        # Time-outer / layer-inner cascade: layer l consumes layer l-1's h_t
        # immediately (no T-long lists of intermediates kept live).
        for t in range(T):
            for l in range(num_layers):
                if l == 0:
                    pre = pre0[t * Bc:(t + 1) * Bc, :]                 # (Bc, 4H)
                else:
                    pre = jnp.dot(h[l - 1].astype(bf16), wih[l],
                                  preferred_element_type=f32) + bias[l]
                # Single 4H-wide recurrent matmul per step (one MXU push).
                gates = pre + jnp.dot(h[l].astype(bf16), whh[l],
                                      preferred_element_type=f32)      # (Bc, 4H)
                # One sigmoid pass over the full 4H vreg (same EUP cost as a 3H
                # slab) + one tanh on the g lanes -> 2 transcendental pushes
                # here, + tanh(c) below.  All activation math stays f32.
                sig = jax.nn.sigmoid(gates)
                i_g = sig[:, 0:H]
                f_g = sig[:, H:2 * H]
                o_g = sig[:, 3 * H:4 * H]
                g_g = jnp.tanh(gates[:, 2 * H:3 * H])
                c[l] = f_g * c[l] + i_g * g_g
                h[l] = o_g * jnp.tanh(c[l])
            # Stash last-layer h_t at lane offset t*H (off the recurrence chain)
            # so the head is one big matmul afterwards.
            hflat_ref[:, t * H:(t + 1) * H] = h[num_layers - 1]
        # TODO(synk): inter-layer dropout (training mode) omitted; this matches
        # eval / dropout=0 semantics of nn.LSTM.

        # Fused mean/log_var head: ONE (Bc, T*H) @ (T*H, 2L) matmul.
        head = jnp.dot(hflat_ref[...].astype(bf16), w_head_ref[...],
                       preferred_element_type=f32) + b_head_ref[...]   # (Bc, 2L)
        mu = head[:, 0:L]
        logvar = head[:, L:2 * L]
        sigma = jnp.exp(0.5 * logvar)

        z_ref[...] = mu + sigma * eps_ref[...]
        # self.kl = sum(sigma^2 + mu^2 - log(sigma) - 1/2); log(sigma)=0.5*logvar
        kl_ref[...] = jnp.sum(sigma * sigma + mu * mu - 0.5 * logvar - 0.5,
                              keepdims=True)

    return kernel


# ----------------------------------------------------------------------------
# Wrapper
# ----------------------------------------------------------------------------
def lstm_encoder_forward(params, x, eps, *, num_batch_blocks=1):
    """x: (B, T, 88) batch-first f32, eps: (B, L) f32. Returns (z, kl).

    num_batch_blocks: set to 2 on v7x so the "parallel" batch grid axis shards
    the batch across both TensorCores; keep 1 on v5e/v6e (single TC — splitting
    the latency-bound recurrence only serializes it).
    """
    B, T, D = x.shape
    H = params["hidden_size"]
    L = params["latent_dims"]
    lstm = params["lstm"]
    num_layers = len(lstm)

    NB = num_batch_blocks
    assert B % NB == 0
    Bc = B // NB
    bf16 = jnp.bfloat16

    # Wrapper-side (one-off) layout work:
    #  * time-major rows per batch block: row = t*Bc + b  -> contiguous,
    #    sublane-aligned per-step slices inside the kernel,
    #  * bf16 cast of all matmul operands (f32 accumulation in-kernel).
    x_tm = (x.reshape(NB, Bc, T, D).transpose(0, 2, 1, 3)
             .reshape(NB, T * Bc, D).astype(bf16))
    eps3 = eps.reshape(NB, Bc, L)

    inputs = [x_tm]
    in_specs = [pl.BlockSpec((None, T * Bc, D), lambda i: (i, 0, 0))]
    for layer in lstm:
        w_ih = layer["w_ih"].astype(bf16)
        w_hh = layer["w_hh"].astype(bf16)
        b = layer["b"]
        inputs += [w_ih, w_hh, b]
        in_specs += [
            pl.BlockSpec(w_ih.shape, lambda i: (0, 0)),
            pl.BlockSpec(w_hh.shape, lambda i: (0, 0)),
            pl.BlockSpec(b.shape, lambda i: (0, 0)),
        ]
    w_head = params["w_head"].astype(bf16)          # (T*H, 2L), un-reshaped
    b_head = params["b_head"]
    inputs += [w_head, b_head, eps3]
    in_specs += [
        pl.BlockSpec(w_head.shape, lambda i: (0, 0)),
        pl.BlockSpec(b_head.shape, lambda i: (0, 0)),
        pl.BlockSpec((None, Bc, L), lambda i: (i, 0, 0)),
    ]

    out_shape = (jax.ShapeDtypeStruct((NB, Bc, L), jnp.float32),
                 jax.ShapeDtypeStruct((NB, 1, 1), jnp.float32))
    out_specs = (pl.BlockSpec((None, Bc, L), lambda i: (i, 0, 0)),
                 pl.BlockSpec((None, 1, 1), lambda i: (i, 0, 0)))

    kernel = make_encoder_kernel(Bc, T, D, H, L, num_layers)
    # NOTE: at these sizes everything is far below VMEM limits on all gens; if
    # H/B are scaled up, re-derive sizing for v7x (64 MiB physical) and set
    # pltpu.CompilerParams(vmem_limit_bytes=...) explicitly.
    z3, kl3 = pl.pallas_call(
        kernel,
        grid=(NB,),
        out_shape=out_shape,
        in_specs=in_specs,
        out_specs=out_specs,
        scratch_shapes=[pltpu.VMEM((Bc, T * H), jnp.float32)],
        compiler_params=pltpu.CompilerParams(
            dimension_semantics=("parallel",)),
    )(*inputs)
    return z3.reshape(B, L), jnp.sum(kl3)


# ----------------------------------------------------------------------------
# Parameter construction (deterministic, PyTorch-like uniform init)
# ----------------------------------------------------------------------------
def _uniform(key, shape, bound):
    return jax.random.uniform(key, shape, jnp.float32, -bound, bound)


def init_params(key, latent_dims, hidden_size, num_layers):
    H, L, T = hidden_size, latent_dims, TOTAL_TICKS
    keys = iter(jax.random.split(key, 4 * num_layers + 8))
    bnd_h = 1.0 / float(H) ** 0.5

    lstm = []
    for layer in range(num_layers):
        d_in = N_NOTES if layer == 0 else H
        lstm.append(dict(
            w_ih=_uniform(next(keys), (d_in, 4 * H), bnd_h),
            w_hh=_uniform(next(keys), (H, 4 * H), bnd_h),
            b=(_uniform(next(keys), (1, 4 * H), bnd_h)
               + _uniform(next(keys), (1, 4 * H), bnd_h)),   # b_ih + b_hh
        ))

    bnd_f = 1.0 / float(H * T) ** 0.5
    w_mu = _uniform(next(keys), (H * T, L), bnd_f)
    b_mu = _uniform(next(keys), (1, L), bnd_f)
    w_lv = _uniform(next(keys), (H * T, L), bnd_f)
    b_lv = _uniform(next(keys), (1, L), bnd_f)

    return dict(
        hidden_size=H, latent_dims=L, lstm=lstm,
        # mean / log_var fused into one head -> a single (T*H, 2L) matmul in
        # the kernel; mu/logvar split with static lane slices.
        w_head=jnp.concatenate([w_mu, w_lv], axis=1),   # (T*H, 2L)
        b_head=jnp.concatenate([b_mu, b_lv], axis=1),   # (1, 2L)
    )


# ----------------------------------------------------------------------------
# Pure-JAX reference (mirrors the PyTorch forward, fp32 HIGHEST precision)
# ----------------------------------------------------------------------------
def reference_forward(params, x, eps):
    B, T, D = x.shape
    H = params["hidden_size"]
    L = params["latent_dims"]
    hp = lax.Precision.HIGHEST

    h_seq = x
    for layer in params["lstm"]:
        wih, whh, b = layer["w_ih"], layer["w_hh"], layer["b"]
        h = jnp.zeros((B, H), jnp.float32)
        c = jnp.zeros((B, H), jnp.float32)
        outs = []
        for t in range(T):
            gates = (jnp.dot(h_seq[:, t, :], wih, precision=hp)
                     + jnp.dot(h, whh, precision=hp) + b)
            i = jax.nn.sigmoid(gates[:, 0:H])
            f = jax.nn.sigmoid(gates[:, H:2 * H])
            g = jnp.tanh(gates[:, 2 * H:3 * H])
            o = jax.nn.sigmoid(gates[:, 3 * H:4 * H])
            c = f * c + i * g
            h = o * jnp.tanh(c)
            outs.append(h)
        h_seq = jnp.stack(outs, axis=1)                      # (B, T, H)

    flat = h_seq.reshape(B, T * H)
    head = jnp.dot(flat, params["w_head"], precision=hp) + params["b_head"]
    mu, logvar = head[:, 0:L], head[:, L:2 * L]
    sigma = jnp.exp(0.5 * logvar)
    z = mu + sigma * eps
    kl = jnp.sum(sigma ** 2 + mu ** 2 - 0.5 * logvar - 0.5)
    return z, kl


if __name__ == "__main__":
    key = jax.random.PRNGKey(0)
    k_param, k_x, k_eps = jax.random.split(key, 3)

    B = 8                 # full f32 sublane tile (review: batch >= 8)
    hidden_size = 32
    latent_dims = 16
    num_layers = 2

    params = init_params(k_param, latent_dims, hidden_size, num_layers)
    x = jax.random.normal(k_x, (B, TOTAL_TICKS, N_NOTES), jnp.float32)
    eps = jax.random.normal(k_eps, (B, latent_dims), jnp.float32)

    # num_batch_blocks=1 (default); set to 2 on v7x to use both TensorCores.
    z, kl = lstm_encoder_forward(params, x, eps, num_batch_blocks=1)
    z = jax.block_until_ready(z)
    kl = jax.block_until_ready(kl)
    assert z.shape == (B, latent_dims), z.shape

    z_ref, kl_ref = reference_forward(params, x, eps)
    # Accepted tolerance: kernel uses bf16 MXU operands with f32 accumulation
    # (review item) vs. the fp32 HIGHEST-precision reference.
    assert jnp.allclose(z, z_ref, rtol=5e-2, atol=5e-2), (
        float(jnp.max(jnp.abs(z - z_ref))))
    assert jnp.allclose(kl, kl_ref, rtol=5e-2, atol=1.0), (float(kl), float(kl_ref))
    print("KERNEL_OK")
</pallas_src>

<mosaic_0001>
module attributes {stable_mosaic.version = 11 : i64} {
  func.func @kernel(%arg0: i32, %arg1: memref<1x64x88xbf16, #tpu.memory_space<vmem>>, %arg2: memref<88x128xbf16, #tpu.memory_space<vmem>>, %arg3: memref<32x128xbf16, #tpu.memory_space<vmem>>, %arg4: memref<1x128xf32, #tpu.memory_space<vmem>>, %arg5: memref<32x128xbf16, #tpu.memory_space<vmem>>, %arg6: memref<32x128xbf16, #tpu.memory_space<vmem>>, %arg7: memref<1x128xf32, #tpu.memory_space<vmem>>, %arg8: memref<256x32xbf16, #tpu.memory_space<vmem>>, %arg9: memref<1x32xf32, #tpu.memory_space<vmem>>, %arg10: memref<1x8x16xf32, #tpu.memory_space<vmem>>, %arg11: memref<1x8x16xf32, #tpu.memory_space<vmem>>, %arg12: memref<1x1x1xf32, #tpu.memory_space<vmem>>, %arg13: memref<8x256xf32, #tpu.memory_space<vmem>>) attributes {dimension_semantics = [#tpu.dimension_semantics<parallel>], iteration_bounds = array<i64: 1>, scalar_prefetch = 0 : i64, scratch_operands = 1 : i64, tpu.core_type = #tpu.core_type<tc>, window_params = [{transform_indices = @transform_0, window_bounds = array<i64: 1, 64, 88>}, {pipeline_mode = #tpu.pipeline_mode<synchronous>, transform_indices = @transform_1, window_bounds = array<i64: 88, 128>}, {pipeline_mode = #tpu.pipeline_mode<synchronous>, transform_indices = @transform_2, window_bounds = array<i64: 32, 128>}, {pipeline_mode = #tpu.pipeline_mode<synchronous>, transform_indices = @transform_3, window_bounds = array<i64: 1, 128>}, {pipeline_mode = #tpu.pipeline_mode<synchronous>, transform_indices = @transform_4, window_bounds = array<i64: 32, 128>}, {pipeline_mode = #tpu.pipeline_mode<synchronous>, transform_indices = @transform_5, window_bounds = array<i64: 32, 128>}, {pipeline_mode = #tpu.pipeline_mode<synchronous>, transform_indices = @transform_6, window_bounds = array<i64: 1, 128>}, {pipeline_mode = #tpu.pipeline_mode<synchronous>, transform_indices = @transform_7, window_bounds = array<i64: 256, 32>}, {pipeline_mode = #tpu.pipeline_mode<synchronous>, transform_indices = @transform_8, window_bounds = array<i64: 1, 32>}, {transform_indices = @transform_9, window_bounds = array<i64: 1, 8, 16>}, {transform_indices = @transform_10, window_bounds = array<i64: 1, 8, 16>}, {transform_indices = @transform_11, window_bounds = array<i64: 1, 1, 1>}]} {
    %c0 = arith.constant 0 : index
    %c0_0 = arith.constant 0 : index
    %0 = vector.load %arg2[%c0, %c0_0] : memref<88x128xbf16, #tpu.memory_space<vmem>>, vector<88x128xbf16>
    %c0_1 = arith.constant 0 : index
    %c0_2 = arith.constant 0 : index
    %1 = vector.load %arg5[%c0_1, %c0_2] : memref<32x128xbf16, #tpu.memory_space<vmem>>, vector<32x128xbf16>
    %c0_3 = arith.constant 0 : index
    %c0_4 = arith.constant 0 : index
    %2 = vector.load %arg3[%c0_3, %c0_4] : memref<32x128xbf16, #tpu.memory_space<vmem>>, vector<32x128xbf16>
    %c0_5 = arith.constant 0 : index
    %c0_6 = arith.constant 0 : index
    %3 = vector.load %arg6[%c0_5, %c0_6] : memref<32x128xbf16, #tpu.memory_space<vmem>>, vector<32x128xbf16>
    %c0_7 = arith.constant 0 : index
    %c0_8 = arith.constant 0 : index
    %4 = vector.load %arg4[%c0_7, %c0_8] : memref<1x128xf32, #tpu.memory_space<vmem>>, vector<1x128xf32>
    %c0_9 = arith.constant 0 : index
    %c0_10 = arith.constant 0 : index
    %5 = vector.load %arg7[%c0_9, %c0_10] : memref<1x128xf32, #tpu.memory_space<vmem>>, vector<1x128xf32>
    %c0_11 = arith.constant 0 : index
    %c0_12 = arith.constant 0 : index
    %c0_13 = arith.constant 0 : index
    %6 = vector.load %arg1[%c0_11, %c0_12, %c0_13] : memref<1x64x88xbf16, #tpu.memory_space<vmem>>, vector<1x64x88xbf16>
    %7 = vector.shape_cast %6 : vector<1x64x88xbf16> to vector<64x88xbf16>
    %cst = arith.constant dense<0.000000e+00> : vector<64x128xf32>
    %8 = tpu.matmul %7, %0, %cst {dimension_numbers = #tpu.dot_dimension_numbers<[1], [0], [0], [1], [0, 0, 1, 1], [], []>} : vector<64x88xbf16>, vector<88x128xbf16>, vector<64x128xf32> -> vector<64x128xf32>
    %9 = vector.broadcast %4 : vector<1x128xf32> to vector<64x128xf32>
    %10 = arith.addf %8, %9 : vector<64x128xf32>
    %cst_14 = arith.constant 0.000000e+00 : f32
    %11 = vector.broadcast %cst_14 : f32 to vector<8x32xf32>
    %cst_15 = arith.constant 0.000000e+00 : f32
    %12 = vector.broadcast %cst_15 : f32 to vector<8x32xf32>
    %cst_16 = arith.constant 0.000000e+00 : f32
    %13 = vector.broadcast %cst_16 : f32 to vector<8x32xf32>
    %cst_17 = arith.constant 0.000000e+00 : f32
    %14 = vector.broadcast %cst_17 : f32 to vector<8x32xf32>
    %15 = vector.extract_strided_slice %10 {offsets = [0, 0], sizes = [8, 128], strides = [1, 1]} : vector<64x128xf32> to vector<8x128xf32>
    %16 = arith.truncf %11 : vector<8x32xf32> to vector<8x32xbf16>
    %cst_18 = arith.constant dense<0.000000e+00> : vector<8x128xf32>
    %17 = tpu.matmul %16, %2, %cst_18 {dimension_numbers = #tpu.dot_dimension_numbers<[1], [0], [0], [1], [0, 0, 1, 1], [], []>} : vector<8x32xbf16>, vector<32x128xbf16>, vector<8x128xf32> -> vector<8x128xf32>
    %18 = arith.addf %15, %17 : vector<8x128xf32>
    %19 = arith.negf %18 : vector<8x128xf32>
    %20 = math.exp %19 : vector<8x128xf32>
    %cst_19 = arith.constant 1.000000e+00 : f32
    %21 = vector.broadcast %cst_19 : f32 to vector<8x128xf32>
    %22 = arith.addf %21, %20 : vector<8x128xf32>
    %23 = arith.divf %21, %22 : vector<8x128xf32>
    %24 = vector.extract_strided_slice %23 {offsets = [0, 0], sizes = [8, 32], strides = [1, 1]} : vector<8x128xf32> to vector<8x32xf32>
    %25 = vector.extract_strided_slice %23 {offsets = [0, 32], sizes = [8, 32], strides = [1, 1]} : vector<8x128xf32> to vector<8x32xf32>
    %26 = vector.extract_strided_slice %23 {offsets = [0, 96], sizes = [8, 32], strides = [1, 1]} : vector<8x128xf32> to vector<8x32xf32>
    %27 = vector.extract_strided_slice %18 {offsets = [0, 64], sizes = [8, 32], strides = [1, 1]} : vector<8x128xf32> to vector<8x32xf32>
    %28 = math.tanh %27 : vector<8x32xf32>
    %29 = arith.mulf %25, %13 : vector<8x32xf32>
    %30 = arith.mulf %24, %28 : vector<8x32xf32>
    %31 = arith.addf %29, %30 : vector<8x32xf32>
    %32 = math.tanh %31 : vector<8x32xf32>
    %33 = arith.mulf %26, %32 : vector<8x32xf32>
    %34 = arith.truncf %33 : vector<8x32xf32> to vector<8x32xbf16>
    %cst_20 = arith.constant dense<0.000000e+00> : vector<8x128xf32>
    %35 = tpu.matmul %34, %1, %cst_20 {dimension_numbers = #tpu.dot_dimension_numbers<[1], [0], [0], [1], [0, 0, 1, 1], [], []>} : vector<8x32xbf16>, vector<32x128xbf16>, vector<8x128xf32> -> vector<8x128xf32>
    %36 = vector.broadcast %5 : vector<1x128xf32> to vector<8x128xf32>
    %37 = arith.addf %35, %36 : vector<8x128xf32>
    %38 = arith.truncf %12 : vector<8x32xf32> to vector<8x32xbf16>
    %cst_21 = arith.constant dense<0.000000e+00> : vector<8x128xf32>
    %39 = tpu.matmul %38, %3, %cst_21 {dimension_numbers = #tpu.dot_dimension_numbers<[1], [0], [0], [1], [0, 0, 1, 1], [], []>} : vector<8x32xbf16>, vector<32x128xbf16>, vector<8x128xf32> -> vector<8x128xf32>
    %40 = arith.addf %37, %39 : vector<8x128xf32>
    %41 = arith.negf %40 : vector<8x128xf32>
    %42 = math.exp %41 : vector<8x128xf32>
    %cst_22 = arith.constant 1.000000e+00 : f32
    %43 = vector.broadcast %cst_22 : f32 to vector<8x128xf32>
    %44 = arith.addf %43, %42 : vector<8x128xf32>
    %45 = arith.divf %43, %44 : vector<8x128xf32>
    %46 = vector.extract_strided_slice %45 {offsets = [0, 0], sizes = [8, 32], strides = [1, 1]} : vector<8x128xf32> to vector<8x32xf32>
    %47 = vector.extract_strided_slice %45 {offsets = [0, 32], sizes = [8, 32], strides = [1, 1]} : vector<8x128xf32> to vector<8x32xf32>
    %48 = vector.extract_strided_slice %45 {offsets = [0, 96], sizes = [8, 32], strides = [1, 1]} : vector<8x128xf32> to vector<8x32xf32>
    %49 = vector.extract_strided_slice %40 {offsets = [0, 64], sizes = [8, 32], strides = [1, 1]} : vector<8x128xf32> to vector<8x32xf32>
    %50 = math.tanh %49 : vector<8x32xf32>
    %51 = arith.mulf %47, %14 : vector<8x32xf32>
    %52 = arith.mulf %46, %50 : vector<8x32xf32>
    %53 = arith.addf %51, %52 : vector<8x32xf32>
    %54 = math.tanh %53 : vector<8x32xf32>
    %55 = arith.mulf %48, %54 : vector<8x32xf32>
    %c0_23 = arith.constant 0 : index
    %c0_24 = arith.constant 0 : index
    %56 = vector.load %arg13[%c0_23, %c0_24] : memref<8x256xf32, #tpu.memory_space<vmem>>, vector<8x32xf32>
    tpu.vector_store %arg13[%c0_23, %c0_24], %55 {strides = array<i32>} : memref<8x256xf32, #tpu.memory_space<vmem>>, vector<8x32xf32>,
    %57 = vector.extract_strided_slice %10 {offsets = [8, 0], sizes = [8, 128], strides = [1, 1]} : vector<64x128xf32> to vector<8x128xf32>
    %58 = arith.truncf %33 : vector<8x32xf32> to vector<8x32xbf16>
    %cst_25 = arith.constant dense<0.000000e+00> : vector<8x128xf32>
    %59 = tpu.matmul %58, %2, %cst_25 {dimension_numbers = #tpu.dot_dimension_numbers<[1], [0], [0], [1], [0, 0, 1, 1], [], []>} : vector<8x32xbf16>, vector<32x128xbf16>, vector<8x128xf32> -> vector<8x128xf32>
    %60 = arith.addf %57, %59 : vector<8x128xf32>
    %61 = arith.negf %60 : vector<8x128xf32>
    %62 = math.exp %61 : vector<8x128xf32>
    %cst_26 = arith.constant 1.000000e+00 : f32
    %63 = vector.broadcast %cst_26 : f32 to vector<8x128xf32>
    %64 = arith.addf %63, %62 : vector<8x128xf32>
    %65 = arith.divf %63, %64 : vector<8x128xf32>
    %66 = vector.extract_strided_slice %65 {offsets = [0, 0], sizes = [8, 32], strides = [1, 1]} : vector<8x128xf32> to vector<8x32xf32>
    %67 = vector.extract_strided_slice %65 {offsets = [0, 32], sizes = [8, 32], strides = [1, 1]} : vector<8x128xf32> to vector<8x32xf32>
    %68 = vector.extract_strided_slice %65 {offsets = [0, 96], sizes = [8, 32], strides = [1, 1]} : vector<8x128xf32> to vector<8x32xf32>
    %69 = vector.extract_strided_slice %60 {offsets = [0, 64], sizes = [8, 32], strides = [1, 1]} : vector<8x128xf32> to vector<8x32xf32>
    %70 = math.tanh %69 : vector<8x32xf32>
    %71 = arith.mulf %67, %31 : vector<8x32xf32>
    %72 = arith.mulf %66, %70 : vector<8x32xf32>
    %73 = arith.addf %71, %72 : vector<8x32xf32>
    %74 = math.tanh %73 : vector<8x32xf32>
    %75 = arith.mulf %68, %74 : vector<8x32xf32>
    %76 = arith.truncf %75 : vector<8x32xf32> to vector<8x32xbf16>
    %cst_27 = arith.constant dense<0.000000e+00> : vector<8x128xf32>
    %77 = tpu.matmul %76, %1, %cst_27 {dimension_numbers = #tpu.dot_dimension_numbers<[1], [0], [0], [1], [0, 0, 1, 1], [], []>} : vector<8x32xbf16>, vector<32x128xbf16>, vector<8x128xf32> -> vector<8x128xf32>
    %78 = vector.broadcast %5 : vector<1x128xf32> to vector<8x128xf32>
    %79 = arith.addf %77, %78 : vector<8x128xf32>
    %80 = arith.truncf %55 : vector<8x32xf32> to vector<8x32xbf16>
    %cst_28 = arith.constant dense<0.000000e+00> : vector<8x128xf32>
    %81 = tpu.matmul %80, %3, %cst_28 {dimension_numbers = #tpu.dot_dimension_numbers<[1], [0], [0], [1], [0, 0, 1, 1], [], []>} : vector<8x32xbf16>, vector<32x128xbf16>, vector<8x128xf32> -> vector<8x128xf32>
    %82 = arith.addf %79, %81 : vector<8x128xf32>
    %83 = arith.negf %82 : vector<8x128xf32>
    %84 = math.exp %83 : vector<8x128xf32>
    %cst_29 = arith.constant 1.000000e+00 : f32
    %85 = vector.broadcast %cst_29 : f32 to vector<8x128xf32>
    %86 = arith.addf %85, %84 : vector<8x128xf32>
    %87 = arith.divf %85, %86 : vector<8x128xf32>
    %88 = vector.extract_strided_slice %87 {offsets = [0, 0], sizes = [8, 32], strides = [1, 1]} : vector<8x128xf32> to vector<8x32xf32>
    %89 = vector.extract_strided_slice %87 {offsets = [0, 32], sizes = [8, 32], strides = [1, 1]} : vector<8x128xf32> to vector<8x32xf32>
    %90 = vector.extract_strided_slice %87 {offsets = [0, 96], sizes = [8, 32], strides = [1, 1]} : vector<8x128xf32> to vector<8x32xf32>
    %91 = vector.extract_strided_slice %82 {offsets = [0, 64], sizes = [8, 32], strides = [1, 1]} : vector<8x128xf32> to vector<8x32xf32>
    %92 = math.tanh %91 : vector<8x32xf32>
    %93 = arith.mulf %89, %53 : vector<8x32xf32>
    %94 = arith.mulf %88, %92 : vector<8x32xf32>
    %95 = arith.addf %93, %94 : vector<8x32xf32>
    %96 = math.tanh %95 : vector<8x32xf32>
    %97 = arith.mulf %90, %96 : vector<8x32xf32>
    %c0_30 = arith.constant 0 : index
    %c32 = arith.constant 32 : index
    %98 = vector.load %arg13[%c0_30, %c32] : memref<8x256xf32, #tpu.memory_space<vmem>>, vector<8x32xf32>
    tpu.vector_store %arg13[%c0_30, %c32], %97 {strides = array<i32>} : memref<8x256xf32, #tpu.memory_space<vmem>>, vector<8x32xf32>,
    %99 = vector.extract_strided_slice %10 {offsets = [16, 0], sizes = [8, 128], strides = [1, 1]} : vector<64x128xf32> to vector<8x128xf32>
    %100 = arith.truncf %75 : vector<8x32xf32> to vector<8x32xbf16>
    %cst_31 = arith.constant dense<0.000000e+00> : vector<8x128xf32>
    %101 = tpu.matmul %100, %2, %cst_31 {dimension_numbers = #tpu.dot_dimension_numbers<[1], [0], [0], [1], [0, 0, 1, 1], [], []>} : vector<8x32xbf16>, vector<32x128xbf16>, vector<8x128xf32> -> vector<8x128xf32>
    %102 = arith.addf %99, %101 : vector<8x128xf32>
    %103 = arith.negf %102 : vector<8x128xf32>
    %104 = math.exp %103 : vector<8x128xf32>
    %cst_32 = arith.constant 1.000000e+00 : f32
    %105 = vector.broadcast %cst_32 : f32 to vector<8x128xf32>
    %106 = arith.addf %105, %104 : vector<8x128xf32>
    %107 = arith.divf %105, %106 : vector<8x128xf32>
    %108 = vector.extract_strided_slice %107 {offsets = [0, 0], sizes = [8, 32], strides = [1, 1]} : vector<8x128xf32> to vector<8x32xf32>
    %109 = vector.extract_strided_slice %107 {offsets = [0, 32], sizes = [8, 32], strides = [1, 1]} : vector<8x128xf32> to vector<8x32xf32>
    %110 = vector.extract_strided_slice %107 {offsets = [0, 96], sizes = [8, 32], strides = [1, 1]} : vector<8x128xf32> to vector<8x32xf32>
    %111 = vector.extract_strided_slice %102 {offsets = [0, 64], sizes = [8, 32], strides = [1, 1]} : vector<8x128xf32> to vector<8x32xf32>
    %112 = math.tanh %111 : vector<8x32xf32>
    %113 = arith.mulf %109, %73 : vector<8x32xf32>
    %114 = arith.mulf %108, %112 : vector<8x32xf32>
    %115 = arith.addf %113, %114 : vector<8x32xf32>
    %116 = math.tanh %115 : vector<8x32xf32>
    %117 = arith.mulf %110, %116 : vector<8x32xf32>
    %118 = arith.truncf %117 : vector<8x32xf32> to vector<8x32xbf16>
    %cst_33 = arith.constant dense<0.000000e+00> : vector<8x128xf32>
    %119 = tpu.matmul %118, %1, %cst_33 {dimension_numbers = #tpu.dot_dimension_numbers<[1], [0], [0], [1], [0, 0, 1, 1], [], []>} : vector<8x32xbf16>, vector<32x128xbf16>, vector<8x128xf32> -> vector<8x128xf32>
    %120 = vector.broadcast %5 : vector<1x128xf32> to vector<8x128xf32>
    %121 = arith.addf %119, %120 : vector<8x128xf32>
    %122 = arith.truncf %97 : vector<8x32xf32> to vector<8x32xbf16>
    %cst_34 = arith.constant dense<0.000000e+00> : vector<8x128xf32>
    %123 = tpu.matmul %122, %3, %cst_34 {dimension_numbers = #tpu.dot_dimension_numbers<[1], [0], [0], [1], [0, 0, 1, 1], [], []>} : vector<8x32xbf16>, vector<32x128xbf16>, vector<8x128xf32> -> vector<8x128xf32>
    %124 = arith.addf %121, %123 : vector<8x128xf32>
    %125 = arith.negf %124 : vector<8x128xf32>
    %126 = math.exp %125 : vector<8x128xf32>
    %cst_35 = arith.constant 1.000000e+00 : f32
    %127 = vector.broadcast %cst_35 : f32 to vector<8x128xf32>
    %128 = arith.addf %127, %126 : vector<8x128xf32>
    %129 = arith.divf %127, %128 : vector<8x128xf32>
    %130 = vector.extract_strided_slice %129 {offsets = [0, 0], sizes = [8, 32], strides = [1, 1]} : vector<8x128xf32> to vector<8x32xf32>
    %131 = vector.extract_strided_slice %129 {offsets = [0, 32], sizes = [8, 32], strides = [1, 1]} : vector<8x128xf32> to vector<8x32xf32>
    %132 = vector.extract_strided_slice %129 {offsets = [0, 96], sizes = [8, 32], strides = [1, 1]} : vector<8x128xf32> to vector<8x32xf32>
    %133 = vector.extract_strided_slice %124 {offsets = [0, 64], sizes = [8, 32], strides = [1, 1]} : vector<8x128xf32> to vector<8x32xf32>
    %134 = math.tanh %133 : vector<8x32xf32>
    %135 = arith.mulf %131, %95 : vector<8x32xf32>
    %136 = arith.mulf %130, %134 : vector<8x32xf32>
    %137 = arith.addf %135, %136 : vector<8x32xf32>
    %138 = math.tanh %137 : vector<8x32xf32>
    %139 = arith.mulf %132, %138 : vector<8x32xf32>
    %c0_36 = arith.constant 0 : index
    %c64 = arith.constant 64 : index
    %140 = vector.load %arg13[%c0_36, %c64] : memref<8x256xf32, #tpu.memory_space<vmem>>, vector<8x32xf32>
    tpu.vector_store %arg13[%c0_36, %c64], %139 {strides = array<i32>} : memref<8x256xf32, #tpu.memory_space<vmem>>, vector<8x32xf32>,
    %141 = vector.extract_strided_slice %10 {offsets = [24, 0], sizes = [8, 128], strides = [1, 1]} : vector<64x128xf32> to vector<8x128xf32>
    %142 = arith.truncf %117 : vector<8x32xf32> to vector<8x32xbf16>
    %cst_37 = arith.constant dense<0.000000e+00> : vector<8x128xf32>
    %143 = tpu.matmul %142, %2, %cst_37 {dimension_numbers = #tpu.dot_dimension_numbers<[1], [0], [0], [1], [0, 0, 1, 1], [], []>} : vector<8x32xbf16>, vector<32x128xbf16>, vector<8x128xf32> -> vector<8x128xf32>
    %144 = arith.addf %141, %143 : vector<8x128xf32>
    %145 = arith.negf %144 : vector<8x128xf32>
    %146 = math.exp %145 : vector<8x128xf32>
    %cst_38 = arith.constant 1.000000e+00 : f32
    %147 = vector.broadcast %cst_38 : f32 to vector<8x128xf32>
    %148 = arith.addf %147, %146 : vector<8x128xf32>
    %149 = arith.divf %147, %148 : vector<8x128xf32>
    %150 = vector.extract_strided_slice %149 {offsets = [0, 0], sizes = [8, 32], strides = [1, 1]} : vector<8x128xf32> to vector<8x32xf32>
    %151 = vector.extract_strided_slice %149 {offsets = [0, 32], sizes = [8, 32], strides = [1, 1]} : vector<8x128xf32> to vector<8x32xf32>
    %152 = vector.extract_strided_slice %149 {offsets = [0, 96], sizes = [8, 32], strides = [1, 1]} : vector<8x128xf32> to vector<8x32xf32>
    %153 = vector.extract_strided_slice %144 {offsets = [0, 64], sizes = [8, 32], strides = [1, 1]} : vector<8x128xf32> to vector<8x32xf32>
    %154 = math.tanh %153 : vector<8x32xf32>
    %155 = arith.mulf %151, %115 : vector<8x32xf32>
    %156 = arith.mulf %150, %154 : vector<8x32xf32>
    %157 = arith.addf %155, %156 : vector<8x32xf32>
    %158 = math.tanh %157 : vector<8x32xf32>
    %159 = arith.mulf %152, %158 : vector<8x32xf32>
    %160 = arith.truncf %159 : vector<8x32xf32> to vector<8x32xbf16>
    %cst_39 = arith.constant dense<0.000000e+00> : vector<8x128xf32>
    %161 = tpu.matmul %160, %1, %cst_39 {dimension_numbers = #tpu.dot_dimension_numbers<[1], [0], [0], [1], [0, 0, 1, 1], [], []>} : vector<8x32xbf16>, vector<32x128xbf16>, vector<8x128xf32> -> vector<8x128xf32>
    %162 = vector.broadcast %5 : vector<1x128xf32> to vector<8x128xf32>
    %163 = arith.addf %161, %162 : vector<8x128xf32>
    %164 = arith.truncf %139 : vector<8x32xf32> to vector<8x32xbf16>
    %cst_40 = arith.constant dense<0.000000e+00> : vector<8x128xf32>
    %165 = tpu.matmul %164, %3, %cst_40 {dimension_numbers = #tpu.dot_dimension_numbers<[1], [0], [0], [1], [0, 0, 1, 1], [], []>} : vector<8x32xbf16>, vector<32x128xbf16>, vector<8x128xf32> -> vector<8x128xf32>
    %166 = arith.addf %163, %165 : vector<8x128xf32>
    %167 = arith.negf %166 : vector<8x128xf32>
    %168 = math.exp %167 : vector<8x128xf32>
    %cst_41 = arith.constant 1.000000e+00 : f32
    %169 = vector.broadcast %cst_41 : f32 to vector<8x128xf32>
    %170 = arith.addf %169, %168 : vector<8x128xf32>
    %171 = arith.divf %169, %170 : vector<8x128xf32>
    %172 = vector.extract_strided_slice %171 {offsets = [0, 0], sizes = [8, 32], strides = [1, 1]} : vector<8x128xf32> to vector<8x32xf32>
    %173 = vector.extract_strided_slice %171 {offsets = [0, 32], sizes = [8, 32], strides = [1, 1]} : vector<8x128xf32> to vector<8x32xf32>
    %174 = vector.extract_strided_slice %171 {offsets = [0, 96], sizes = [8, 32], strides = [1, 1]} : vector<8x128xf32> to vector<8x32xf32>
    %175 = vector.extract_strided_slice %166 {offsets = [0, 64], sizes = [8, 32], strides = [1, 1]} : vector<8x128xf32> to vector<8x32xf32>
    %176 = math.tanh %175 : vector<8x32xf32>
    %177 = arith.mulf %173, %137 : vector<8x32xf32>
    %178 = arith.mulf %172, %176 : vector<8x32xf32>
    %179 = arith.addf %177, %178 : vector<8x32xf32>
    %180 = math.tanh %179 : vector<8x32xf32>
    %181 = arith.mulf %174, %180 : vector<8x32xf32>
    %c0_42 = arith.constant 0 : index
    %c96 = arith.constant 96 : index
    %182 = vector.load %arg13[%c0_42, %c96] : memref<8x256xf32, #tpu.memory_space<vmem>>, vector<8x32xf32>
    tpu.vector_store %arg13[%c0_42, %c96], %181 {strides = array<i32>} : memref<8x256xf32, #tpu.memory_space<vmem>>, vector<8x32xf32>,
    %183 = vector.extract_strided_slice %10 {offsets = [32, 0], sizes = [8, 128], strides = [1, 1]} : vector<64x128xf32> to vector<8x128xf32>
    %184 = arith.truncf %159 : vector<8x32xf32> to vector<8x32xbf16>
    %cst_43 = arith.constant dense<0.000000e+00> : vector<8x128xf32>
    %185 = tpu.matmul %184, %2, %cst_43 {dimension_numbers = #tpu.dot_dimension_numbers<[1], [0], [0], [1], [0, 0, 1, 1], [], []>} : vector<8x32xbf16>, vector<32x128xbf16>, vector<8x128xf32> -> vector<8x128xf32>
    %186 = arith.addf %183, %185 : vector<8x128xf32>
    %187 = arith.negf %186 : vector<8x128xf32>
    %188 = math.exp %187 : vector<8x128xf32>
    %cst_44 = arith.constant 1.000000e+00 : f32
    %189 = vector.broadcast %cst_44 : f32 to vector<8x128xf32>
    %190 = arith.addf %189, %188 : vector<8x128xf32>
    %191 = arith.divf %189, %190 : vector<8x128xf32>
    %192 = vector.extract_strided_slice %191 {offsets = [0, 0], sizes = [8, 32], strides = [1, 1]} : vector<8x128xf32> to vector<8x32xf32>
    %193 = vector.extract_strided_slice %191 {offsets = [0, 32], sizes = [8, 32], strides = [1, 1]} : vector<8x128xf32> to vector<8x32xf32>
    %194 = vector.extract_strided_slice %191 {offsets = [0, 96], sizes = [8, 32], strides = [1, 1]} : vector<8x128xf32> to vector<8x32xf32>
    %195 = vector.extract_strided_slice %186 {offsets = [0, 64], sizes = [8, 32], strides = [1, 1]} : vector<8x128xf32> to vector<8x32xf32>
    %196 = math.tanh %195 : vector<8x32xf32>
    %197 = arith.mulf %193, %157 : vector<8x32xf32>
    %198 = arith.mulf %192, %196 : vector<8x32xf32>
    %199 = arith.addf %197, %198 : vector<8x32xf32>
    %200 = math.tanh %199 : vector<8x32xf32>
    %201 = arith.mulf %194, %200 : vector<8x32xf32>
    %202 = arith.truncf %201 : vector<8x32xf32> to vector<8x32xbf16>
    %cst_45 = arith.constant dense<0.000000e+00> : vector<8x128xf32>
    %203 = tpu.matmul %202, %1, %cst_45 {dimension_numbers = #tpu.dot_dimension_numbers<[1], [0], [0], [1], [0, 0, 1, 1], [], []>} : vector<8x32xbf16>, vector<32x128xbf16>, vector<8x128xf32> -> vector<8x128xf32>
    %204 = vector.broadcast %5 : vector<1x128xf32> to vector<8x128xf32>
    %205 = arith.addf %203, %204 : vector<8x128xf32>
    %206 = arith.truncf %181 : vector<8x32xf32> to vector<8x32xbf16>
    %cst_46 = arith.constant dense<0.000000e+00> : vector<8x128xf32>
    %207 = tpu.matmul %206, %3, %cst_46 {dimension_numbers = #tpu.dot_dimension_numbers<[1], [0], [0], [1], [0, 0, 1, 1], [], []>} : vector<8x32xbf16>, vector<32x128xbf16>, vector<8x128xf32> -> vector<8x128xf32>
    %208 = arith.addf %205, %207 : vector<8x128xf32>
    %209 = arith.negf %208 : vector<8x128xf32>
    %210 = math.exp %209 : vector<8x128xf32>
    %cst_47 = arith.constant 1.000000e+00 : f32
    %211 = vector.broadcast %cst_47 : f32 to vector<8x128xf32>
    %212 = arith.addf %211, %210 : vector<8x128xf32>
    %213 = arith.divf %211, %212 : vector<8x128xf32>
    %214 = vector.extract_strided_slice %213 {offsets = [0, 0], sizes = [8, 32], strides = [1, 1]} : vector<8x128xf32> to vector<8x32xf32>
    %215 = vector.extract_strided_slice %213 {offsets = [0, 32], sizes = [8, 32], strides = [1, 1]} : vector<8x128xf32> to vector<8x32xf32>
    %216 = vector.extract_strided_slice %213 {offsets = [0, 96], sizes = [8, 32], strides = [1, 1]} : vector<8x128xf32> to vector<8x32xf32>
    %217 = vector.extract_strided_slice %208 {offsets = [0, 64], sizes = [8, 32], strides = [1, 1]} : vector<8x128xf32> to vector<8x32xf32>
    %218 = math.tanh %217 : vector<8x32xf32>
    %219 = arith.mulf %215, %179 : vector<8x32xf32>
    %220 = arith.mulf %214, %218 : vector<8x32xf32>
    %221 = arith.addf %219, %220 : vector<8x32xf32>
    %222 = math.tanh %221 : vector<8x32xf32>
    %223 = arith.mulf %216, %222 : vector<8x32xf32>
    %c0_48 = arith.constant 0 : index
    %c128 = arith.constant 128 : index
    %224 = vector.load %arg13[%c0_48, %c128] : memref<8x256xf32, #tpu.memory_space<vmem>>, vector<8x32xf32>
    tpu.vector_store %arg13[%c0_48, %c128], %223 {strides = array<i32>} : memref<8x256xf32, #tpu.memory_space<vmem>>, vector<8x32xf32>,
    %225 = vector.extract_strided_slice %10 {offsets = [40, 0], sizes = [8, 128], strides = [1, 1]} : vector<64x128xf32> to vector<8x128xf32>
    %226 = arith.truncf %201 : vector<8x32xf32> to vector<8x32xbf16>
    %cst_49 = arith.constant dense<0.000000e+00> : vector<8x128xf32>
    %227 = tpu.matmul %226, %2, %cst_49 {dimension_numbers = #tpu.dot_dimension_numbers<[1], [0], [0], [1], [0, 0, 1, 1], [], []>} : vector<8x32xbf16>, vector<32x128xbf16>, vector<8x128xf32> -> vector<8x128xf32>
    %228 = arith.addf %225, %227 : vector<8x128xf32>
    %229 = arith.negf %228 : vector<8x128xf32>
    %230 = math.exp %229 : vector<8x128xf32>
    %cst_50 = arith.constant 1.000000e+00 : f32
    %231 = vector.broadcast %cst_50 : f32 to vector<8x128xf32>
    %232 = arith.addf %231, %230 : vector<8x128xf32>
    %233 = arith.divf %231, %232 : vector<8x128xf32>
    %234 = vector.extract_strided_slice %233 {offsets = [0, 0], sizes = [8, 32], strides = [1, 1]} : vector<8x128xf32> to vector<8x32xf32>
    %235 = vector.extract_strided_slice %233 {offsets = [0, 32], sizes = [8, 32], strides = [1, 1]} : vector<8x128xf32> to vector<8x32xf32>
    %236 = vector.extract_strided_slice %233 {offsets = [0, 96], sizes = [8, 32], strides = [1, 1]} : vector<8x128xf32> to vector<8x32xf32>
    %237 = vector.extract_strided_slice %228 {offsets = [0, 64], sizes = [8, 32], strides = [1, 1]} : vector<8x128xf32> to vector<8x32xf32>
    %238 = math.tanh %237 : vector<8x32xf32>
    %239 = arith.mulf %235, %199 : vector<8x32xf32>
    %240 = arith.mulf %234, %238 : vector<8x32xf32>
    %241 = arith.addf %239, %240 : vector<8x32xf32>
    %242 = math.tanh %241 : vector<8x32xf32>
    %243 = arith.mulf %236, %242 : vector<8x32xf32>
    %244 = arith.truncf %243 : vector<8x32xf32> to vector<8x32xbf16>
    %cst_51 = arith.constant dense<0.000000e+00> : vector<8x128xf32>
    %245 = tpu.matmul %244, %1, %cst_51 {dimension_numbers = #tpu.dot_dimension_numbers<[1], [0], [0], [1], [0, 0, 1, 1], [], []>} : vector<8x32xbf16>, vector<32x128xbf16>, vector<8x128xf32> -> vector<8x128xf32>
    %246 = vector.broadcast %5 : vector<1x128xf32> to vector<8x128xf32>
    %247 = arith.addf %245, %246 : vector<8x128xf32>
    %248 = arith.truncf %223 : vector<8x32xf32> to vector<8x32xbf16>
    %cst_52 = arith.constant dense<0.000000e+00> : vector<8x128xf32>
    %249 = tpu.matmul %248, %3, %cst_52 {dimension_numbers = #tpu.dot_dimension_numbers<[1], [0], [0], [1], [0, 0, 1, 1], [], []>} : vector<8x32xbf16>, vector<32x128xbf16>, vector<8x128xf32> -> vector<8x128xf32>
    %250 = arith.addf %247, %249 : vector<8x128xf32>
    %251 = arith.negf %250 : vector<8x128xf32>
    %252 = math.exp %251 : vector<8x128xf32>
    %cst_53 = arith.constant 1.000000e+00 : f32
    %253 = vector.broadcast %cst_53 : f32 to vector<8x128xf32>
    %254 = arith.addf %253, %252 : vector<8x128xf32>
    %255 = arith.divf %253, %254 : vector<8x128xf32>
    %256 = vector.extract_strided_slice %255 {offsets = [0, 0], sizes = [8, 32], strides = [1, 1]} : vector<8x128xf32> to vector<8x32xf32>
    %257 = vector.extract_strided_slice %255 {offsets = [0, 32], sizes = [8, 32], strides = [1, 1]} : vector<8x128xf32> to vector<8x32xf32>
    %258 = vector.extract_strided_slice %255 {offsets = [0, 96], sizes = [8, 32], strides = [1, 1]} : vector<8x128xf32> to vector<8x32xf32>
    %259 = vector.extract_strided_slice %250 {offsets = [0, 64], sizes = [8, 32], strides = [1, 1]} : vector<8x128xf32> to vector<8x32xf32>
    %260 = math.tanh %259 : vector<8x32xf32>
    %261 = arith.mulf %257, %221 : vector<8x32xf32>
    %262 = arith.mulf %256, %260 : vector<8x32xf32>
    %263 = arith.addf %261, %262 : vector<8x32xf32>
    %264 = math.tanh %263 : vector<8x32xf32>
    %265 = arith.mulf %258, %264 : vector<8x32xf32>
    %c0_54 = arith.constant 0 : index
    %c160 = arith.constant 160 : index
    %266 = vector.load %arg13[%c0_54, %c160] : memref<8x256xf32, #tpu.memory_space<vmem>>, vector<8x32xf32>
    tpu.vector_store %arg13[%c0_54, %c160], %265 {strides = array<i32>} : memref<8x256xf32, #tpu.memory_space<vmem>>, vector<8x32xf32>,
    %267 = vector.extract_strided_slice %10 {offsets = [48, 0], sizes = [8, 128], strides = [1, 1]} : vector<64x128xf32> to vector<8x128xf32>
    %268 = arith.truncf %243 : vector<8x32xf32> to vector<8x32xbf16>
    %cst_55 = arith.constant dense<0.000000e+00> : vector<8x128xf32>
    %269 = tpu.matmul %268, %2, %cst_55 {dimension_numbers = #tpu.dot_dimension_numbers<[1], [0], [0], [1], [0, 0, 1, 1], [], []>} : vector<8x32xbf16>, vector<32x128xbf16>, vector<8x128xf32> -> vector<8x128xf32>
    %270 = arith.addf %267, %269 : vector<8x128xf32>
    %271 = arith.negf %270 : vector<8x128xf32>
    %272 = math.exp %271 : vector<8x128xf32>
    %cst_56 = arith.constant 1.000000e+00 : f32
    %273 = vector.broadcast %cst_56 : f32 to vector<8x128xf32>
    %274 = arith.addf %273, %272 : vector<8x128xf32>
    %275 = arith.divf %273, %274 : vector<8x128xf32>
    %276 = vector.extract_strided_slice %275 {offsets = [0, 0], sizes = [8, 32], strides = [1, 1]} : vector<8x128xf32> to vector<8x32xf32>
    %277 = vector.extract_strided_slice %275 {offsets = [0, 32], sizes = [8, 32], strides = [1, 1]} : vector<8x128xf32> to vector<8x32xf32>
    %278 = vector.extract_strided_slice %275 {offsets = [0, 96], sizes = [8, 32], strides = [1, 1]} : vector<8x128xf32> to vector<8x32xf32>
    %279 = vector.extract_strided_slice %270 {offsets = [0, 64], sizes = [8, 32], strides = [1, 1]} : vector<8x128xf32> to vector<8x32xf32>
    %280 = math.tanh %279 : vector<8x32xf32>
    %281 = arith.mulf %277, %241 : vector<8x32xf32>
    %282 = arith.mulf %276, %280 : vector<8x32xf32>
    %283 = arith.addf %281, %282 : vector<8x32xf32>
    %284 = math.tanh %283 : vector<8x32xf32>
    %285 = arith.mulf %278, %284 : vector<8x32xf32>
    %286 = arith.truncf %285 : vector<8x32xf32> to vector<8x32xbf16>
    %cst_57 = arith.constant dense<0.000000e+00> : vector<8x128xf32>
    %287 = tpu.matmul %286, %1, %cst_57 {dimension_numbers = #tpu.dot_dimension_numbers<[1], [0], [0], [1], [0, 0, 1, 1], [], []>} : vector<8x32xbf16>, vector<32x128xbf16>, vector<8x128xf32> -> vector<8x128xf32>
    %288 = vector.broadcast %5 : vector<1x128xf32> to vector<8x128xf32>
    %289 = arith.addf %287, %288 : vector<8x128xf32>
    %290 = arith.truncf %265 : vector<8x32xf32> to vector<8x32xbf16>
    %cst_58 = arith.constant dense<0.000000e+00> : vector<8x128xf32>
    %291 = tpu.matmul %290, %3, %cst_58 {dimension_numbers = #tpu.dot_dimension_numbers<[1], [0], [0], [1], [0, 0, 1, 1], [], []>} : vector<8x32xbf16>, vector<32x128xbf16>, vector<8x128xf32> -> vector<8x128xf32>
    %292 = arith.addf %289, %291 : vector<8x128xf32>
    %293 = arith.negf %292 : vector<8x128xf32>
    %294 = math.exp %293 : vector<8x128xf32>
    %cst_59 = arith.constant 1.000000e+00 : f32
    %295 = vector.broadcast %cst_59 : f32 to vector<8x128xf32>
    %296 = arith.addf %295, %294 : vector<8x128xf32>
    %297 = arith.divf %295, %296 : vector<8x128xf32>
    %298 = vector.extract_strided_slice %297 {offsets = [0, 0], sizes = [8, 32], strides = [1, 1]} : vector<8x128xf32> to vector<8x32xf32>
    %299 = vector.extract_strided_slice %297 {offsets = [0, 32], sizes = [8, 32], strides = [1, 1]} : vector<8x128xf32> to vector<8x32xf32>
    %300 = vector.extract_strided_slice %297 {offsets = [0, 96], sizes = [8, 32], strides = [1, 1]} : vector<8x128xf32> to vector<8x32xf32>
    %301 = vector.extract_strided_slice %292 {offsets = [0, 64], sizes = [8, 32], strides = [1, 1]} : vector<8x128xf32> to vector<8x32xf32>
    %302 = math.tanh %301 : vector<8x32xf32>
    %303 = arith.mulf %299, %263 : vector<8x32xf32>
    %304 = arith.mulf %298, %302 : vector<8x32xf32>
    %305 = arith.addf %303, %304 : vector<8x32xf32>
    %306 = math.tanh %305 : vector<8x32xf32>
    %307 = arith.mulf %300, %306 : vector<8x32xf32>
    %c0_60 = arith.constant 0 : index
    %c192 = arith.constant 192 : index
    %308 = vector.load %arg13[%c0_60, %c192] : memref<8x256xf32, #tpu.memory_space<vmem>>, vector<8x32xf32>
    tpu.vector_store %arg13[%c0_60, %c192], %307 {strides = array<i32>} : memref<8x256xf32, #tpu.memory_space<vmem>>, vector<8x32xf32>,
    %309 = vector.extract_strided_slice %10 {offsets = [56, 0], sizes = [8, 128], strides = [1, 1]} : vector<64x128xf32> to vector<8x128xf32>
    %310 = arith.truncf %285 : vector<8x32xf32> to vector<8x32xbf16>
    %cst_61 = arith.constant dense<0.000000e+00> : vector<8x128xf32>
    %311 = tpu.matmul %310, %2, %cst_61 {dimension_numbers = #tpu.dot_dimension_numbers<[1], [0], [0], [1], [0, 0, 1, 1], [], []>} : vector<8x32xbf16>, vector<32x128xbf16>, vector<8x128xf32> -> vector<8x128xf32>
    %312 = arith.addf %309, %311 : vector<8x128xf32>
    %313 = arith.negf %312 : vector<8x128xf32>
    %314 = math.exp %313 : vector<8x128xf32>
    %cst_62 = arith.constant 1.000000e+00 : f32
    %315 = vector.broadcast %cst_62 : f32 to vector<8x128xf32>
    %316 = arith.addf %315, %314 : vector<8x128xf32>
    %317 = arith.divf %315, %316 : vector<8x128xf32>
    %318 = vector.extract_strided_slice %317 {offsets = [0, 0], sizes = [8, 32], strides = [1, 1]} : vector<8x128xf32> to vector<8x32xf32>
    %319 = vector.extract_strided_slice %317 {offsets = [0, 32], sizes = [8, 32], strides = [1, 1]} : vector<8x128xf32> to vector<8x32xf32>
    %320 = vector.extract_strided_slice %317 {offsets = [0, 96], sizes = [8, 32], strides = [1, 1]} : vector<8x128xf32> to vector<8x32xf32>
    %321 = vector.extract_strided_slice %312 {offsets = [0, 64], sizes = [8, 32], strides = [1, 1]} : vector<8x128xf32> to vector<8x32xf32>
    %322 = math.tanh %321 : vector<8x32xf32>
    %323 = arith.mulf %319, %283 : vector<8x32xf32>
    %324 = arith.mulf %318, %322 : vector<8x32xf32>
    %325 = arith.addf %323, %324 : vector<8x32xf32>
    %326 = math.tanh %325 : vector<8x32xf32>
    %327 = arith.mulf %320, %326 : vector<8x32xf32>
    %328 = arith.truncf %327 : vector<8x32xf32> to vector<8x32xbf16>
    %cst_63 = arith.constant dense<0.000000e+00> : vector<8x128xf32>
    %329 = tpu.matmul %328, %1, %cst_63 {dimension_numbers = #tpu.dot_dimension_numbers<[1], [0], [0], [1], [0, 0, 1, 1], [], []>} : vector<8x32xbf16>, vector<32x128xbf16>, vector<8x128xf32> -> vector<8x128xf32>
    %330 = vector.broadcast %5 : vector<1x128xf32> to vector<8x128xf32>
    %331 = arith.addf %329, %330 : vector<8x128xf32>
    %332 = arith.truncf %307 : vector<8x32xf32> to vector<8x32xbf16>
    %cst_64 = arith.constant dense<0.000000e+00> : vector<8x128xf32>
    %333 = tpu.matmul %332, %3, %cst_64 {dimension_numbers = #tpu.dot_dimension_numbers<[1], [0], [0], [1], [0, 0, 1, 1], [], []>} : vector<8x32xbf16>, vector<32x128xbf16>, vector<8x128xf32> -> vector<8x128xf32>
    %334 = arith.addf %331, %333 : vector<8x128xf32>
    %335 = arith.negf %334 : vector<8x128xf32>
    %336 = math.exp %335 : vector<8x128xf32>
    %cst_65 = arith.constant 1.000000e+00 : f32
    %337 = vector.broadcast %cst_65 : f32 to vector<8x128xf32>
    %338 = arith.addf %337, %336 : vector<8x128xf32>
    %339 = arith.divf %337, %338 : vector<8x128xf32>
    %340 = vector.extract_strided_slice %339 {offsets = [0, 0], sizes = [8, 32], strides = [1, 1]} : vector<8x128xf32> to vector<8x32xf32>
    %341 = vector.extract_strided_slice %339 {offsets = [0, 32], sizes = [8, 32], strides = [1, 1]} : vector<8x128xf32> to vector<8x32xf32>
    %342 = vector.extract_strided_slice %339 {offsets = [0, 96], sizes = [8, 32], strides = [1, 1]} : vector<8x128xf32> to vector<8x32xf32>
    %343 = vector.extract_strided_slice %334 {offsets = [0, 64], sizes = [8, 32], strides = [1, 1]} : vector<8x128xf32> to vector<8x32xf32>
    %344 = math.tanh %343 : vector<8x32xf32>
    %345 = arith.mulf %341, %305 : vector<8x32xf32>
    %346 = arith.mulf %340, %344 : vector<8x32xf32>
    %347 = arith.addf %345, %346 : vector<8x32xf32>
    %348 = math.tanh %347 : vector<8x32xf32>
    %349 = arith.mulf %342, %348 : vector<8x32xf32>
    %c0_66 = arith.constant 0 : index
    %c224 = arith.constant 224 : index
    %350 = vector.load %arg13[%c0_66, %c224] : memref<8x256xf32, #tpu.memory_space<vmem>>, vector<8x32xf32>
    tpu.vector_store %arg13[%c0_66, %c224], %349 {strides = array<i32>} : memref<8x256xf32, #tpu.memory_space<vmem>>, vector<8x32xf32>,
    %c0_67 = arith.constant 0 : index
    %c0_68 = arith.constant 0 : index
    %351 = vector.load %arg13[%c0_67, %c0_68] : memref<8x256xf32, #tpu.memory_space<vmem>>, vector<8x256xf32>
    %352 = arith.truncf %351 : vector<8x256xf32> to vector<8x256xbf16>
    %c0_69 = arith.constant 0 : index
    %c0_70 = arith.constant 0 : index
    %353 = vector.load %arg8[%c0_69, %c0_70] : memref<256x32xbf16, #tpu.memory_space<vmem>>, vector<256x32xbf16>
    %cst_71 = arith.constant dense<0.000000e+00> : vector<8x32xf32>
    %354 = tpu.matmul %352, %353, %cst_71 {dimension_numbers = #tpu.dot_dimension_numbers<[1], [0], [0], [1], [0, 0, 1, 1], [], []>} : vector<8x256xbf16>, vector<256x32xbf16>, vector<8x32xf32> -> vector<8x32xf32>
    %c0_72 = arith.constant 0 : index
    %c0_73 = arith.constant 0 : index
    %355 = vector.load %arg9[%c0_72, %c0_73] : memref<1x32xf32, #tpu.memory_space<vmem>>, vector<1x32xf32>
    %356 = vector.broadcast %355 : vector<1x32xf32> to vector<8x32xf32>
    %357 = arith.addf %354, %356 : vector<8x32xf32>
    %358 = vector.extract_strided_slice %357 {offsets = [0, 0], sizes = [8, 16], strides = [1, 1]} : vector<8x32xf32> to vector<8x16xf32>
    %359 = vector.extract_strided_slice %357 {offsets = [0, 16], sizes = [8, 16], strides = [1, 1]} : vector<8x32xf32> to vector<8x16xf32>
    %cst_74 = arith.constant 5.000000e-01 : f32
    %360 = vector.broadcast %cst_74 : f32 to vector<8x16xf32>
    %361 = arith.mulf %360, %359 : vector<8x16xf32>
    %362 = math.exp %361 : vector<8x16xf32>
    %c0_75 = arith.constant 0 : index
    %c0_76 = arith.constant 0 : index
    %c0_77 = arith.constant 0 : index
    %363 = vector.load %arg10[%c0_75, %c0_76, %c0_77] : memref<1x8x16xf32, #tpu.memory_space<vmem>>, vector<1x8x16xf32>
    %364 = vector.shape_cast %363 : vector<1x8x16xf32> to vector<8x16xf32>
    %365 = arith.mulf %362, %364 : vector<8x16xf32>
    %366 = arith.addf %358, %365 : vector<8x16xf32>
    %c0_78 = arith.constant 0 : index
    %c0_79 = arith.constant 0 : index
    %c0_80 = arith.constant 0 : index
    %367 = vector.load %arg11[%c0_78, %c0_79, %c0_80] : memref<1x8x16xf32, #tpu.memory_space<vmem>>, vector<1x8x16xf32>
    %368 = vector.shape_cast %367 : vector<1x8x16xf32> to vector<8x16xf32>
    %369 = vector.shape_cast %366 : vector<8x16xf32> to vector<1x8x16xf32>
    tpu.vector_store %arg11[%c0_78, %c0_79, %c0_80], %369 {strides = array<i32>} : memref<1x8x16xf32, #tpu.memory_space<vmem>>, vector<1x8x16xf32>,
    %370 = arith.mulf %362, %362 : vector<8x16xf32>
    %371 = arith.mulf %358, %358 : vector<8x16xf32>
    %372 = arith.addf %370, %371 : vector<8x16xf32>
    %cst_81 = arith.constant 5.000000e-01 : f32
    %373 = vector.broadcast %cst_81 : f32 to vector<8x16xf32>
    %374 = arith.mulf %373, %359 : vector<8x16xf32>
    %375 = arith.subf %372, %374 : vector<8x16xf32>
    %cst_82 = arith.constant 5.000000e-01 : f32
    %376 = vector.broadcast %cst_82 : f32 to vector<8x16xf32>
    %377 = arith.subf %375, %376 : vector<8x16xf32>
    %378 = vector.shape_cast %377 : vector<8x16xf32> to vector<1x8x16xf32>
    %cst_83 = arith.constant dense<0.000000e+00> : vector<1xf32>
    %379 = vector.multi_reduction <add>, %378, %cst_83 [1, 2] : vector<1x8x16xf32> to vector<1xf32>
    %380 = vector.shape_cast %379 : vector<1xf32> to vector<1x1x1xf32>
    %381 = vector.extract %380[0, 0, 0] : f32 from vector<1x1x1xf32>
    %382 = vector.broadcast %381 : f32 to vector<1x1xf32>
    %c0_84 = arith.constant 0 : index
    %c0_85 = arith.constant 0 : index
    %c0_86 = arith.constant 0 : index
    %383 = vector.load %arg12[%c0_84, %c0_85, %c0_86] : memref<1x1x1xf32, #tpu.memory_space<vmem>>, vector<1x1x1xf32>
    %384 = vector.shape_cast %383 : vector<1x1x1xf32> to vector<1x1xf32>
    %385 = vector.shape_cast %382 : vector<1x1xf32> to vector<1x1x1xf32>
    tpu.vector_store %arg12[%c0_84, %c0_85, %c0_86], %385 {strides = array<i32>} : memref<1x1x1xf32, #tpu.memory_space<vmem>>, vector<1x1x1xf32>,
    return
  }
  func.func @transform_0(%arg0: i32) -> (i32, i32, i32) {
    %c0_i32 = arith.constant 0 : i32
    %c0_i32_0 = arith.constant 0 : i32
    %c0_i32_1 = arith.constant 0 : i32
    return %arg0, %c0_i32, %c0_i32_0 : i32, i32, i32
  }
  func.func @transform_1(%arg0: i32) -> (i32, i32) {
    %c0_i32 = arith.constant 0 : i32
    %c0_i32_0 = arith.constant 0 : i32
    %c0_i32_1 = arith.constant 0 : i32
    return %c0_i32, %c0_i32_0 : i32, i32
  }
  func.func @transform_2(%arg0: i32) -> (i32, i32) {
    %c0_i32 = arith.constant 0 : i32
    %c0_i32_0 = arith.constant 0 : i32
    %c0_i32_1 = arith.constant 0 : i32
    return %c0_i32, %c0_i32_0 : i32, i32
  }
  func.func @transform_3(%arg0: i32) -> (i32, i32) {
    %c0_i32 = arith.constant 0 : i32
    %c0_i32_0 = arith.constant 0 : i32
    %c0_i32_1 = arith.constant 0 : i32
    return %c0_i32, %c0_i32_0 : i32, i32
  }
  func.func @transform_4(%arg0: i32) -> (i32, i32) {
    %c0_i32 = arith.constant 0 : i32
    %c0_i32_0 = arith.constant 0 : i32
    %c0_i32_1 = arith.constant 0 : i32
    return %c0_i32, %c0_i32_0 : i32, i32
  }
  func.func @transform_5(%arg0: i32) -> (i32, i32) {
    %c0_i32 = arith.constant 0 : i32
    %c0_i32_0 = arith.constant 0 : i32
    %c0_i32_1 = arith.constant 0 : i32
    return %c0_i32, %c0_i32_0 : i32, i32
  }
  func.func @transform_6(%arg0: i32) -> (i32, i32) {
    %c0_i32 = arith.constant 0 : i32
    %c0_i32_0 = arith.constant 0 : i32
    %c0_i32_1 = arith.constant 0 : i32
    return %c0_i32, %c0_i32_0 : i32, i32
  }
  func.func @transform_7(%arg0: i32) -> (i32, i32) {
    %c0_i32 = arith.constant 0 : i32
    %c0_i32_0 = arith.constant 0 : i32
    %c0_i32_1 = arith.constant 0 : i32
    return %c0_i32, %c0_i32_0 : i32, i32
  }
  func.func @transform_8(%arg0: i32) -> (i32, i32) {
    %c0_i32 = arith.constant 0 : i32
    %c0_i32_0 = arith.constant 0 : i32
    %c0_i32_1 = arith.constant 0 : i32
    return %c0_i32, %c0_i32_0 : i32, i32
  }
  func.func @transform_9(%arg0: i32) -> (i32, i32, i32) {
    %c0_i32 = arith.constant 0 : i32
    %c0_i32_0 = arith.constant 0 : i32
    %c0_i32_1 = arith.constant 0 : i32
    return %arg0, %c0_i32, %c0_i32_0 : i32, i32, i32
  }
  func.func @transform_10(%arg0: i32) -> (i32, i32, i32) {
    %c0_i32 = arith.constant 0 : i32
    %c0_i32_0 = arith.constant 0 : i32
    %c0_i32_1 = arith.constant 0 : i32
    return %arg0, %c0_i32, %c0_i32_0 : i32, i32, i32
  }
  func.func @transform_11(%arg0: i32) -> (i32, i32, i32) {
    %c0_i32 = arith.constant 0 : i32
    %c0_i32_0 = arith.constant 0 : i32
    %c0_i32_1 = arith.constant 0 : i32
    return %arg0, %c0_i32, %c0_i32_0 : i32, i32, i32
  }
}

</mosaic_0001>

<llo_original>
// kernel: tpu_custom_call.1
$region0: #{tpu_custom_call.1}
  #allocation0 [shape = 'u32[]', space=smem, size = 0x4, offset = 0x4, fixed_abs, tag = 'smem constant byte address 0x4 - core index']
  #allocation1 [shape = 'u32[144,128]{1,0:T(1,128)}', space=vmem, size = 0x12000, scoped, tag = 'internal scratch']
  #allocation2 [shape = 'f32[8,256]{1,0:T(8,128)}', space=vmem, size = 0x2000, scoped, tag = 'scratch operand']
  %s0 = inlined_call_operand.vmem [shape: bf16[1,64,88], index: 0, kind: input, shape index: {}]
  %s1 = inlined_call_operand.vmem [shape: bf16[88,128], index: 1, kind: input, shape index: {}]
  %s2 = inlined_call_operand.vmem [shape: bf16[32,128], index: 2, kind: input, shape index: {}]
  %s3 = inlined_call_operand.vmem [shape: f32[1,128], index: 3, kind: input, shape index: {}]
  %s4 = inlined_call_operand.vmem [shape: bf16[32,128], index: 4, kind: input, shape index: {}]
  %s5 = inlined_call_operand.vmem [shape: bf16[32,128], index: 5, kind: input, shape index: {}]
  %s6 = inlined_call_operand.vmem [shape: f32[1,128], index: 6, kind: input, shape index: {}]
  %s7 = inlined_call_operand.vmem [shape: bf16[256,32], index: 7, kind: input, shape index: {}]
  %s8 = inlined_call_operand.vmem [shape: f32[1,32], index: 8, kind: input, shape index: {}]
  %s9 = inlined_call_operand.vmem [shape: f32[1,8,16], index: 9, kind: input, shape index: {}]
  %s10 = inlined_call_operand.hbm [shape: f32[1,8,16], index: 10, kind: output, shape index: {0}]
  %s11 = inlined_call_operand.hbm [shape: f32[1,1,1], index: 11, kind: output, shape index: {1}]
  %12 = xla_tuple %s10, %s11
  %s13 = sld [smem:[#allocation0]]
  $region58: #{tpu_custom_call.1} parent=0
    _
  %s15 = ssub.s32 1, %s13
  %s16 = scalar_select 0, %s15, %s13
  $region1: #{tpu_custom_call.1} parent=0
    #allocation3 [shape = 'u8[4096]{0}', space=vmem, size = 0x1000, scoped, tag = 'output window, operand 0, single buffered']
    #allocation4 [shape = 's32[1]{0}', space=sflag, size = 0x4, scoped, tag = 'scoped memory for tpu_custom_call.1']
    #allocation5 [shape = 'u8[512]{0}', space=vmem, size = 0x400, scoped, tag = 'output window, operand 1, single buffered']
    #allocation6 [shape = 's32[1]{0}', space=sflag, size = 0x4, scoped, tag = 'scoped memory for tpu_custom_call.1']
    %17 = vsyncpa [#allocation4], 0
    %18 = vsyncpa [#allocation6], 0
    // Predicated region
    $region2: #{tpu_custom_call.1} parent=1 // pred_check
      _
    $region3: #{tpu_custom_call.1} parent=1 // pred_check_branch
      %20 = sbr.rel (0) target = $region5
    $region4: #{tpu_custom_call.1} parent=1 // pred_region
      _
    $region5: #{tpu_custom_call.1} parent=1 // pred_fallthru
      _
    // Predicated region
    $region6: #{tpu_custom_call.1} parent=1 // pred_check
      _
    $region7: #{tpu_custom_call.1} parent=1 // pred_check_branch
      %22 = sbr.rel (0) target = $region9
    $region8: #{tpu_custom_call.1} parent=1 // pred_region
      _
    $region9: #{tpu_custom_call.1} parent=1 // pred_fallthru
      _
    // Predicated region
    $region10: #{tpu_custom_call.1} parent=1 // pred_check
      _
    $region11: #{tpu_custom_call.1} parent=1 // pred_check_branch
      %24 = sbr.rel (0) target = $region13
    $region12: #{tpu_custom_call.1} parent=1 // pred_region
      _
    $region13: #{tpu_custom_call.1} parent=1 // pred_fallthru
      _
    // Predicated region
    $region14: #{tpu_custom_call.1} parent=1 // pred_check
      _
    $region15: #{tpu_custom_call.1} parent=1 // pred_check_branch
      %26 = sbr.rel (0) target = $region17
    $region16: #{tpu_custom_call.1} parent=1 // pred_region
      _
    $region17: #{tpu_custom_call.1} parent=1 // pred_fallthru
      _
    // Predicated region
    $region18: #{tpu_custom_call.1} parent=1 // pred_check
      _
    $region19: #{tpu_custom_call.1} parent=1 // pred_check_branch
      %28 = sbr.rel (0) target = $region21
    $region20: #{tpu_custom_call.1} parent=1 // pred_region
      _
    $region21: #{tpu_custom_call.1} parent=1 // pred_fallthru
      _
    // Predicated region
    $region22: #{tpu_custom_call.1} parent=1 // pred_check
      _
    $region23: #{tpu_custom_call.1} parent=1 // pred_check_branch
      %30 = sbr.rel (0) target = $region25
    $region24: #{tpu_custom_call.1} parent=1 // pred_region
      _
    $region25: #{tpu_custom_call.1} parent=1 // pred_fallthru
      _
    // Predicated region
    $region26: #{tpu_custom_call.1} parent=1 // pred_check
      _
    $region27: #{tpu_custom_call.1} parent=1 // pred_check_branch
      %32 = sbr.rel (0) target = $region29
    $region28: #{tpu_custom_call.1} parent=1 // pred_region
      _
    $region29: #{tpu_custom_call.1} parent=1 // pred_fallthru
      _
    // Predicated region
    $region30: #{tpu_custom_call.1} parent=1 // pred_check
      _
    $region31: #{tpu_custom_call.1} parent=1 // pred_check_branch
      %34 = sbr.rel (0) target = $region33
    $region32: #{tpu_custom_call.1} parent=1 // pred_region
      _
    $region33: #{tpu_custom_call.1} parent=1 // pred_fallthru
      _
    // Predicated region
    $region34: #{tpu_custom_call.1} parent=1 // pred_check
      _
    $region35: #{tpu_custom_call.1} parent=1 // pred_check_branch
      %36 = sbr.rel (0) target = $region37
    $region36: #{tpu_custom_call.1} parent=1 // pred_region
      _
    $region37: #{tpu_custom_call.1} parent=1 // pred_fallthru
      _
    // Predicated region
    $region38: #{tpu_custom_call.1} parent=1 // pred_check
      _
    $region39: #{tpu_custom_call.1} parent=1 // pred_check_branch
      %38 = sbr.rel (0) target = $region41
    $region40: #{tpu_custom_call.1} parent=1 // pred_region
      _
    $region41: #{tpu_custom_call.1} parent=1 // pred_fallthru
      _
    %v40 = vld [vmem:[%s1] sm:$0xf]
    %v41 = vld [vmem:[%s1 + $0x4] sm:$0xf]
    %v42 = vld [vmem:[%s1 + $0x8] sm:$0xf]
    %v43 = vld [vmem:[%s1 + $0xc] sm:$0xf]
    %v44 = vld [vmem:[%s1 + $0x10] sm:$0xf]
    %v45 = vld [vmem:[%s1 + $0x14] sm:$0xf]
    %v46 = vld [vmem:[%s1 + $0x18] sm:$0xf]
    %v47 = vld [vmem:[%s1 + $0x1c] sm:$0xf]
    %v48 = vld [vmem:[%s1 + $0x20] sm:$0xf]
    %v49 = vld [vmem:[%s1 + $0x24] sm:$0xf]
    %v50 = vld [vmem:[%s1 + $0x28] sm:$0xf]
    %v51 = vld [vmem:[%s4] sm:$0xf]
    %v52 = vld [vmem:[%s4 + $0x4] sm:$0xf]
    %v53 = vld [vmem:[%s4 + $0x8] sm:$0xf]
    %v54 = vld [vmem:[%s4 + $0xc] sm:$0xf]
    %v55 = vld [vmem:[%s2] sm:$0xf]
    %v56 = vld [vmem:[%s2 + $0x4] sm:$0xf]
    %v57 = vld [vmem:[%s2 + $0x8] sm:$0xf]
    %v58 = vld [vmem:[%s2 + $0xc] sm:$0xf]
    %v59 = vld [vmem:[%s5] sm:$0xf]
    %v60 = vld [vmem:[%s5 + $0x4] sm:$0xf]
    %v61 = vld [vmem:[%s5 + $0x8] sm:$0xf]
    %v62 = vld [vmem:[%s5 + $0xc] sm:$0xf]
    %v63 = vld [vmem:[%s3] sm:$0x1]
    %v64 = vld [vmem:[%s6] sm:$0x1]
    %v65 = vld [vmem:[%s0] sm:$0xf]
    %v66 = vld [vmem:[%s0 + $0x4] sm:$0xf]
    %v67 = vld [vmem:[%s0 + $0x8] sm:$0xf]
    %v68 = vld [vmem:[%s0 + $0xc] sm:$0xf]
    %v69 = vld [vmem:[%s0 + $0x10] sm:$0xf]
    %v70 = vld [vmem:[%s0 + $0x14] sm:$0xf]
    %v71 = vld [vmem:[%s0 + $0x18] sm:$0xf]
    %v72 = vld [vmem:[%s0 + $0x1c] sm:$0xf]
    %v74 = vlaneseq
    %v75 = vshrl.u32 %v74, 7
    %v76 = vsub.s32 0, %v75
    %v77 = vrot.slane %v63, %v76
    %v87 = vunpack.c.l.b16 %v65
    %v88 = vunpack.c.l.b16 %v66
    %v89 = vunpack.c.l.b16 %v67
    %v90 = vunpack.c.l.b16 %v68
    %v91 = vunpack.c.l.b16 %v69
    %v92 = vunpack.c.l.b16 %v70
    %v93 = vunpack.c.l.b16 %v71
    %v94 = vunpack.c.l.b16 %v72
    %v95 = vpack.c.b16 %v88, %v87
    %v96 = vpack.c.b16 %v90, %v89
    %v97 = vpack.c.b16 %v92, %v91
    %v98 = vpack.c.b16 %v94, %v93
    %v110 = vunpack.c.l.b16 %v40
    %v111 = vunpack.c.l.b16 %v41
    %v112 = vunpack.c.l.b16 %v42
    %v113 = vunpack.c.l.b16 %v43
    %v114 = vunpack.c.l.b16 %v44
    %v115 = vunpack.c.l.b16 %v45
    %v116 = vunpack.c.l.b16 %v46
    %v117 = vunpack.c.l.b16 %v47
    %v118 = vunpack.c.l.b16 %v48
    %v119 = vunpack.c.l.b16 %v49
    %v120 = vunpack.c.l.b16 %v50
    %v121 = vpack.c.b16 %v111, %v110
    %v122 = vpack.c.b16 %v113, %v112
    %v123 = vpack.c.b16 %v115, %v114
    %v124 = vpack.c.b16 %v117, %v116
    %v125 = vpack.c.b16 %v119, %v118
    %v126 = vpack.c.b16 %v120, %v120
    %vm132 = vcmask 719872
    %v134 = vsel %vm132, %v95, 0
    %v137 = vsel %vm132, %v96, 0
    %v140 = vsel %vm132, %v97, 0
    %v143 = vsel %vm132, %v98, 0
    %vm145 = vcmask 1043456
    %v147 = vsel %vm145, %v126, 0
    %149 = vmatprep.subr.bf16.mxu0 0
    %150 = vmatpush1.bf16.msra.mxu0 %v121
    %151 = vmatprep.subr.bf16.mxu0 0
    %152 = vmatpush1.bf16.msra.mxu0 %v122
    %153 = vmatprep.subr.bf16.mxu0 0
    %154 = vmatpush1.bf16.msra.mxu0 %v123
    %155 = vmatprep.subr.bf16.mxu0 0
    %156 = vmatpush1.bf16.msra.mxu0 %v124
    %157 = vmatprep.subr.bf16.mxu0 0
    %158 = vmatpush1.bf16.msra.mxu0 %v125
    %159 = vmatprep.subr.bf16.mxu0 0
    %160 = vmatpush1.bf16.msra.mxu0 %v147
    %161 = vmatprep.subr.bf16.mxu0 0
    %162 = vmatpush1.bf16.msra.mxu0 0
    %163 = vmatprep.subr.bf16.mxu0 0
    %164 = vmatpush1.bf16.msra.mxu0 0
    %165 = vmatprep.subr.bf16.mxu0 0
    %166 = vmatpush1.bf16.msra.mxu0 0
    %167 = vmatprep.subr.bf16.mxu0 0
    %168 = vmatpush1.bf16.msra.mxu0 0
    %169 = vmatprep.subr.bf16.mxu0 0
    %170 = vmatpush1.bf16.msra.mxu0 0
    %171 = vmatprep.subr.bf16.mxu0 0
    %172 = vmatpush1.bf16.msra.mxu0 0
    %173 = vmatprep.subr.bf16.mxu0 0
    %174 = vmatpush1.bf16.msra.mxu0 0
    %175 = vmatprep.subr.bf16.mxu0 0
    %176 = vmatpush1.bf16.msra.mxu0 0
    %177 = vmatprep.subr.bf16.mxu0 0
    %178 = vmatpush1.bf16.msra.mxu0 0
    %179 = vmatprep.subr.bf16.mxu0 0
    %180 = vmatpush1.bf16.msra.mxu0 0
    %181 = vmatprep.mubr.bf16.mxu0 0
    %182 = vmatmul.mubr.bf16.gmra.mrb[0].mxu0 %v134
    %v183 = vpop.f32.mrb[0].mxu0
    %v184 = vadd.f32 %v77, %v183
    %v185 = vpop.f32.mrb[0].mxu0
    %v186 = vpop.f32.mrb[0].mxu0
    %v187 = vadd.f32 %v77, %v186
    %v188 = vpop.f32.mrb[0].mxu0
    %189 = vmatprep.mubr.bf16.mxu0 0
    %190 = vmatmul.mubr.bf16.gmra.mrb[0].mxu0 %v137
    %v191 = vpop.f32.mrb[0].mxu0
    %v192 = vadd.f32 %v77, %v191
    %v193 = vpop.f32.mrb[0].mxu0
    %v194 = vpop.f32.mrb[0].mxu0
    %v195 = vadd.f32 %v77, %v194
    %v196 = vpop.f32.mrb[0].mxu0
    %197 = vmatprep.mubr.bf16.mxu0 0
    %198 = vmatmul.mubr.bf16.gmra.mrb[0].mxu0 %v140
    %v199 = vpop.f32.mrb[0].mxu0
    %v200 = vadd.f32 %v77, %v199
    %v201 = vpop.f32.mrb[0].mxu0
    %v202 = vpop.f32.mrb[0].mxu0
    %v203 = vadd.f32 %v77, %v202
    %v204 = vpop.f32.mrb[0].mxu0
    %205 = vmatprep.mubr.bf16.mxu0 0
    %206 = vmatmul.mubr.bf16.gmra.mrb[0].mxu0 %v143
    %v207 = vpop.f32.mrb[0].mxu0
    %v208 = vadd.f32 %v77, %v207
    %v209 = vpop.f32.mrb[0].mxu0
    %v210 = vpop.f32.mrb[0].mxu0
    %v211 = vadd.f32 %v77, %v210
    %v212 = vpop.f32.mrb[0].mxu0
    %213 = vdwg.mxu0
    %v218 = vunpack.c.l.b16 %v55
    %v219 = vunpack.c.l.b16 %v56
    %v220 = vunpack.c.l.b16 %v57
    %v221 = vunpack.c.l.b16 %v58
    %v222 = vpack.c.b16 %v219, %v218
    %v223 = vpack.c.b16 %v221, %v220
    %vm226 = vcmask 261120
    %v228 = vsel %vm226, 0, 0
    %230 = vmatprep.subr.bf16.mxu0 0
    %231 = vmatpush1.bf16.msra.mxu0 %v222
    %232 = vmatprep.subr.bf16.mxu0 0
    %233 = vmatpush1.bf16.msra.mxu0 %v223
    %234 = vmatprep.subr.bf16.mxu0 0
    %235 = vmatpush1.bf16.msra.mxu0 0
    %236 = vmatprep.subr.bf16.mxu0 0
    %237 = vmatpush1.bf16.msra.mxu0 0
    %238 = vmatprep.subr.bf16.mxu0 0
    %239 = vmatpush1.bf16.msra.mxu0 0
    %240 = vmatprep.subr.bf16.mxu0 0
    %241 = vmatpush1.bf16.msra.mxu0 0
    %242 = vmatprep.subr.bf16.mxu0 0
    %243 = vmatpush1.bf16.msra.mxu0 0
    %244 = vmatprep.subr.bf16.mxu0 0
    %245 = vmatpush1.bf16.msra.mxu0 0
    %246 = vmatprep.subr.bf16.mxu0 0
    %247 = vmatpush1.bf16.msra.mxu0 0
    %248 = vmatprep.subr.bf16.mxu0 0
    %249 = vmatpush1.bf16.msra.mxu0 0
    %250 = vmatprep.subr.bf16.mxu0 0
    %251 = vmatpush1.bf16.msra.mxu0 0
    %252 = vmatprep.subr.bf16.mxu0 0
    %253 = vmatpush1.bf16.msra.mxu0 0
    %254 = vmatprep.subr.bf16.mxu0 0
    %255 = vmatpush1.bf16.msra.mxu0 0
    %256 = vmatprep.subr.bf16.mxu0 0
    %257 = vmatpush1.bf16.msra.mxu0 0
    %258 = vmatprep.subr.bf16.mxu0 0
    %259 = vmatpush1.bf16.msra.mxu0 0
    %260 = vmatprep.subr.bf16.mxu0 0
    %261 = vmatpush1.bf16.msra.mxu0 0
    %262 = vmatprep.mubr.bf16.mxu0 0
    %263 = vmatmul.mubr.bf16.gmra.mrb[0].mxu0 %v228
    %v264 = vpop.f32.mrb[0].mxu0
    %v265 = vadd.f32 0.0, %v264
    %v266 = vpop.f32.mrb[0].mxu0
    %v267 = vpop.f32.mrb[0].mxu0
    %v268 = vpop.f32.mrb[0].mxu0
    %269 = vdwg.mxu0
    %v270 = vadd.f32 %v184, %v265
    %v271 = vxor.u32 %v270, 2147483648
    %v272 = vmul.f32 %v271, 1.442695
    %v273 = vpow.pop %v272
    %v274 = vadd.f32 %v273, 1.0
    %v275 = vrcp.pop %v274
    %v276 = vmul.f32 1.0, %v275
    %v277 = vtanh.pop %v270
    %v278 = vmul.f32 %v276, 0.0
    %280 = vrot.lane.b32.xlu0 %v277, 64
    %v281 = vpop.permute.xlu0 %280
    %v283 = vmul.f32 %v276, %v281
    %285 = vrot.lane.b32.xlu0 %v283, 32
    %v286 = vpop.permute.xlu0 %285
    %v288 = vadd.f32 %v278, %v286
    %v289 = vtanh.pop %v288
    %291 = vrot.lane.b32.xlu0 %v289, 64
    %v292 = vpop.permute.xlu0 %291
    %v294 = vmul.f32 %v276, %v292
    %v295 = vpack.c.bf16 %v294, %v294
    %v297 = vlaneseq
    %v298 = vshrl.u32 %v297, 7
    %v299 = vsub.s32 0, %v298
    %v300 = vrot.slane %v64, %v299
    %303 = vrot.lane.b32.xlu0 %v295, 32
    %v304 = vpop.permute.xlu0 %303
    %v309 = vunpack.c.l.b16 %v51
    %v310 = vunpack.c.l.b16 %v52
    %v311 = vunpack.c.l.b16 %v53
    %v312 = vunpack.c.l.b16 %v54
    %v313 = vpack.c.b16 %v310, %v309
    %v314 = vpack.c.b16 %v312, %v311
    %v318 = vsel %vm226, %v304, 0
    %320 = vmatprep.subr.bf16.mxu0 0
    %321 = vmatpush1.bf16.msra.mxu0 %v313
    %322 = vmatprep.subr.bf16.mxu0 0
    %323 = vmatpush1.bf16.msra.mxu0 %v314
    %324 = vmatprep.subr.bf16.mxu0 0
    %325 = vmatpush1.bf16.msra.mxu0 0
    %326 = vmatprep.subr.bf16.mxu0 0
    %327 = vmatpush1.bf16.msra.mxu0 0
    %328 = vmatprep.subr.bf16.mxu0 0
    %329 = vmatpush1.bf16.msra.mxu0 0
    %330 = vmatprep.subr.bf16.mxu0 0
    %331 = vmatpush1.bf16.msra.mxu0 0
    %332 = vmatprep.subr.bf16.mxu0 0
    %333 = vmatpush1.bf16.msra.mxu0 0
    %334 = vmatprep.subr.bf16.mxu0 0
    %335 = vmatpush1.bf16.msra.mxu0 0
    %336 = vmatprep.subr.bf16.mxu0 0
    %337 = vmatpush1.bf16.msra.mxu0 0
    %338 = vmatprep.subr.bf16.mxu0 0
    %339 = vmatpush1.bf16.msra.mxu0 0
    %340 = vmatprep.subr.bf16.mxu0 0
    %341 = vmatpush1.bf16.msra.mxu0 0
    %342 = vmatprep.subr.bf16.mxu0 0
    %343 = vmatpush1.bf16.msra.mxu0 0
    %344 = vmatprep.subr.bf16.mxu0 0
    %345 = vmatpush1.bf16.msra.mxu0 0
    %346 = vmatprep.subr.bf16.mxu0 0
    %347 = vmatpush1.bf16.msra.mxu0 0
    %348 = vmatprep.subr.bf16.mxu0 0
    %349 = vmatpush1.bf16.msra.mxu0 0
    %350 = vmatprep.subr.bf16.mxu0 0
    %351 = vmatpush1.bf16.msra.mxu0 0
    %352 = vmatprep.mubr.bf16.mxu0 0
    %353 = vmatmul.mubr.bf16.gmra.mrb[0].mxu0 %v318
    %v354 = vpop.f32.mrb[0].mxu0
    %v355 = vadd.f32 %v300, %v354
    %v356 = vpop.f32.mrb[0].mxu0
    %v357 = vpop.f32.mrb[0].mxu0
    %v358 = vpop.f32.mrb[0].mxu0
    %359 = vdwg.mxu0
    %v364 = vunpack.c.l.b16 %v59
    %v365 = vunpack.c.l.b16 %v60
    %v366 = vunpack.c.l.b16 %v61
    %v367 = vunpack.c.l.b16 %v62
    %v368 = vpack.c.b16 %v365, %v364
    %v369 = vpack.c.b16 %v367, %v366
    %372 = vmatprep.subr.bf16.mxu0 0
    %373 = vmatpush1.bf16.msra.mxu0 %v368
    %374 = vmatprep.subr.bf16.mxu0 0
    %375 = vmatpush1.bf16.msra.mxu0 %v369
    %376 = vmatprep.subr.bf16.mxu0 0
    %377 = vmatpush1.bf16.msra.mxu0 0
    %378 = vmatprep.subr.bf16.mxu0 0
    %379 = vmatpush1.bf16.msra.mxu0 0
    %380 = vmatprep.subr.bf16.mxu0 0
    %381 = vmatpush1.bf16.msra.mxu0 0
    %382 = vmatprep.subr.bf16.mxu0 0
    %383 = vmatpush1.bf16.msra.mxu0 0
    %384 = vmatprep.subr.bf16.mxu0 0
    %385 = vmatpush1.bf16.msra.mxu0 0
    %386 = vmatprep.subr.bf16.mxu0 0
    %387 = vmatpush1.bf16.msra.mxu0 0
    %388 = vmatprep.subr.bf16.mxu0 0
    %389 = vmatpush1.bf16.msra.mxu0 0
    %390 = vmatprep.subr.bf16.mxu0 0
    %391 = vmatpush1.bf16.msra.mxu0 0
    %392 = vmatprep.subr.bf16.mxu0 0
    %393 = vmatpush1.bf16.msra.mxu0 0
    %394 = vmatprep.subr.bf16.mxu0 0
    %395 = vmatpush1.bf16.msra.mxu0 0
    %396 = vmatprep.subr.bf16.mxu0 0
    %397 = vmatpush1.bf16.msra.mxu0 0
    %398 = vmatprep.subr.bf16.mxu0 0
    %399 = vmatpush1.bf16.msra.mxu0 0
    %400 = vmatprep.subr.bf16.mxu0 0
    %401 = vmatpush1.bf16.msra.mxu0 0
    %402 = vmatprep.subr.bf16.mxu0 0
    %403 = vmatpush1.bf16.msra.mxu0 0
    %404 = vmatprep.mubr.bf16.mxu0 0
    %405 = vmatmul.mubr.bf16.gmra.mrb[0].mxu0 %v228
    %v406 = vpop.f32.mrb[0].mxu0
    %v407 = vadd.f32 0.0, %v406
    %v408 = vpop.f32.mrb[0].mxu0
    %v409 = vpop.f32.mrb[0].mxu0
    %v410 = vpop.f32.mrb[0].mxu0
    %411 = vdwg.mxu0
    %v412 = vadd.f32 %v355, %v407
    %v413 = vxor.u32 %v412, 2147483648
    %v414 = vmul.f32 %v413, 1.442695
    %v415 = vpow.pop %v414
    %v416 = vadd.f32 %v415, 1.0
    %v417 = vrcp.pop %v416
    %v418 = vmul.f32 1.0, %v417
    %v419 = vtanh.pop %v412
    %v420 = vmul.f32 %v418, 0.0
    %422 = vrot.lane.b32.xlu0 %v419, 64
    %v423 = vpop.permute.xlu0 %422
    %v425 = vmul.f32 %v418, %v423
    %427 = vrot.lane.b32.xlu0 %v425, 32
    %v428 = vpop.permute.xlu0 %427
    %v430 = vadd.f32 %v420, %v428
    %v431 = vtanh.pop %v430
    %433 = vrot.lane.b32.xlu0 %v431, 64
    %v434 = vpop.permute.xlu0 %433
    %v436 = vmul.f32 %v418, %v434
    %438 = vrot.lane.b32.xlu0 %v436, 32
    %v439 = vpop.permute.xlu0 %438
    %441 = vst.msk [vmem:[#allocation2] sm:$0xff] %vm226, %v439
    %442 = vmatprep.subr.bf16.mxu0 0
    %443 = vmatpush1.bf16.msra.mxu0 %v222
    %444 = vmatprep.subr.bf16.mxu0 0
    %445 = vmatpush1.bf16.msra.mxu0 %v223
    %446 = vmatprep.subr.bf16.mxu0 0
    %447 = vmatpush1.bf16.msra.mxu0 0
    %448 = vmatprep.subr.bf16.mxu0 0
    %449 = vmatpush1.bf16.msra.mxu0 0
    %450 = vmatprep.subr.bf16.mxu0 0
    %451 = vmatpush1.bf16.msra.mxu0 0
    %452 = vmatprep.subr.bf16.mxu0 0
    %453 = vmatpush1.bf16.msra.mxu0 0
    %454 = vmatprep.subr.bf16.mxu0 0
    %455 = vmatpush1.bf16.msra.mxu0 0
    %456 = vmatprep.subr.bf16.mxu0 0
    %457 = vmatpush1.bf16.msra.mxu0 0
    %458 = vmatprep.subr.bf16.mxu0 0
    %459 = vmatpush1.bf16.msra.mxu0 0
    %460 = vmatprep.subr.bf16.mxu0 0
    %461 = vmatpush1.bf16.msra.mxu0 0
    %462 = vmatprep.subr.bf16.mxu0 0
    %463 = vmatpush1.bf16.msra.mxu0 0
    %464 = vmatprep.subr.bf16.mxu0 0
    %465 = vmatpush1.bf16.msra.mxu0 0
    %466 = vmatprep.subr.bf16.mxu0 0
    %467 = vmatpush1.bf16.msra.mxu0 0
    %468 = vmatprep.subr.bf16.mxu0 0
    %469 = vmatpush1.bf16.msra.mxu0 0
    %470 = vmatprep.subr.bf16.mxu0 0
    %471 = vmatpush1.bf16.msra.mxu0 0
    %472 = vmatprep.subr.bf16.mxu0 0
    %473 = vmatpush1.bf16.msra.mxu0 0
    %474 = vmatprep.mubr.bf16.mxu0 0
    %475 = vmatmul.mubr.bf16.gmra.mrb[0].mxu0 %v318
    %v476 = vpop.f32.mrb[0].mxu0
    %v477 = vadd.f32 0.0, %v476
    %v478 = vpop.f32.mrb[0].mxu0
    %v479 = vpop.f32.mrb[0].mxu0
    %v480 = vpop.f32.mrb[0].mxu0
    %481 = vdwg.mxu0
    %v482 = vadd.f32 %v187, %v477
    %v483 = vxor.u32 %v482, 2147483648
    %v484 = vmul.f32 %v483, 1.442695
    %v485 = vpow.pop %v484
    %v486 = vadd.f32 %v485, 1.0
    %v487 = vrcp.pop %v486
    %v488 = vmul.f32 1.0, %v487
    %v489 = vtanh.pop %v482
    %v490 = vmul.f32 %v488, %v288
    %492 = vrot.lane.b32.xlu0 %v489, 64
    %v493 = vpop.permute.xlu0 %492
    %v495 = vmul.f32 %v488, %v493
    %497 = vrot.lane.b32.xlu0 %v495, 32
    %v498 = vpop.permute.xlu0 %497
    %v500 = vadd.f32 %v490, %v498
    %v501 = vtanh.pop %v500
    %503 = vrot.lane.b32.xlu0 %v501, 64
    %v504 = vpop.permute.xlu0 %503
    %v506 = vmul.f32 %v488, %v504
    %v507 = vpack.c.bf16 %v506, %v506
    %509 = vrot.lane.b32.xlu0 %v507, 32
    %v510 = vpop.permute.xlu0 %509
    %v512 = vsel %vm226, %v510, 0
    %514 = vmatprep.subr.bf16.mxu0 0
    %515 = vmatpush1.bf16.msra.mxu0 %v313
    %516 = vmatprep.subr.bf16.mxu0 0
    %517 = vmatpush1.bf16.msra.mxu0 %v314
    %518 = vmatprep.subr.bf16.mxu0 0
    %519 = vmatpush1.bf16.msra.mxu0 0
    %520 = vmatprep.subr.bf16.mxu0 0
    %521 = vmatpush1.bf16.msra.mxu0 0
    %522 = vmatprep.subr.bf16.mxu0 0
    %523 = vmatpush1.bf16.msra.mxu0 0
    %524 = vmatprep.subr.bf16.mxu0 0
    %525 = vmatpush1.bf16.msra.mxu0 0
    %526 = vmatprep.subr.bf16.mxu0 0
    %527 = vmatpush1.bf16.msra.mxu0 0
    %528 = vmatprep.subr.bf16.mxu0 0
    %529 = vmatpush1.bf16.msra.mxu0 0
    %530 = vmatprep.subr.bf16.mxu0 0
    %531 = vmatpush1.bf16.msra.mxu0 0
    %532 = vmatprep.subr.bf16.mxu0 0
    %533 = vmatpush1.bf16.msra.mxu0 0
    %534 = vmatprep.subr.bf16.mxu0 0
    %535 = vmatpush1.bf16.msra.mxu0 0
    %536 = vmatprep.subr.bf16.mxu0 0
    %537 = vmatpush1.bf16.msra.mxu0 0
    %538 = vmatprep.subr.bf16.mxu0 0
    %539 = vmatpush1.bf16.msra.mxu0 0
    %540 = vmatprep.subr.bf16.mxu0 0
    %541 = vmatpush1.bf16.msra.mxu0 0
    %542 = vmatprep.subr.bf16.mxu0 0
    %543 = vmatpush1.bf16.msra.mxu0 0
    %544 = vmatprep.subr.bf16.mxu0 0
    %545 = vmatpush1.bf16.msra.mxu0 0
    %546 = vmatprep.mubr.bf16.mxu0 0
    %547 = vmatmul.mubr.bf16.gmra.mrb[0].mxu0 %v512
    %v548 = vpop.f32.mrb[0].mxu0
    %v549 = vadd.f32 %v300, %v548
    %v550 = vpop.f32.mrb[0].mxu0
    %v551 = vpop.f32.mrb[0].mxu0
    %v552 = vpop.f32.mrb[0].mxu0
    %553 = vdwg.mxu0
    %v554 = vpack.c.bf16 %v436, %v436
    %556 = vrot.lane.b32.xlu0 %v554, 32
    %v557 = vpop.permute.xlu0 %556
    %v559 = vsel %vm226, %v557, 0
    %561 = vmatprep.subr.bf16.mxu0 0
    %562 = vmatpush1.bf16.msra.mxu0 %v368
    %563 = vmatprep.subr.bf16.mxu0 0
    %564 = vmatpush1.bf16.msra.mxu0 %v369
    %565 = vmatprep.subr.bf16.mxu0 0
    %566 = vmatpush1.bf16.msra.mxu0 0
    %567 = vmatprep.subr.bf16.mxu0 0
    %568 = vmatpush1.bf16.msra.mxu0 0
    %569 = vmatprep.subr.bf16.mxu0 0
    %570 = vmatpush1.bf16.msra.mxu0 0
    %571 = vmatprep.subr.bf16.mxu0 0
    %572 = vmatpush1.bf16.msra.mxu0 0
    %573 = vmatprep.subr.bf16.mxu0 0
    %574 = vmatpush1.bf16.msra.mxu0 0
    %575 = vmatprep.subr.bf16.mxu0 0
    %576 = vmatpush1.bf16.msra.mxu0 0
    %577 = vmatprep.subr.bf16.mxu0 0
    %578 = vmatpush1.bf16.msra.mxu0 0
    %579 = vmatprep.subr.bf16.mxu0 0
    %580 = vmatpush1.bf16.msra.mxu0 0
    %581 = vmatprep.subr.bf16.mxu0 0
    %582 = vmatpush1.bf16.msra.mxu0 0
    %583 = vmatprep.subr.bf16.mxu0 0
    %584 = vmatpush1.bf16.msra.mxu0 0
    %585 = vmatprep.subr.bf16.mxu0 0
    %586 = vmatpush1.bf16.msra.mxu0 0
    %587 = vmatprep.subr.bf16.mxu0 0
    %588 = vmatpush1.bf16.msra.mxu0 0
    %589 = vmatprep.subr.bf16.mxu0 0
    %590 = vmatpush1.bf16.msra.mxu0 0
    %591 = vmatprep.subr.bf16.mxu0 0
    %592 = vmatpush1.bf16.msra.mxu0 0
    %593 = vmatprep.mubr.bf16.mxu0 0
    %594 = vmatmul.mubr.bf16.gmra.mrb[0].mxu0 %v559
    %v595 = vpop.f32.mrb[0].mxu0
    %v596 = vadd.f32 0.0, %v595
    %v597 = vpop.f32.mrb[0].mxu0
    %v598 = vpop.f32.mrb[0].mxu0
    %v599 = vpop.f32.mrb[0].mxu0
    %600 = vdwg.mxu0
    %v601 = vadd.f32 %v549, %v596
    %v602 = vxor.u32 %v601, 2147483648
    %v603 = vmul.f32 %v602, 1.442695
    %v604 = vpow.pop %v603
    %v605 = vadd.f32 %v604, 1.0
    %v606 = vrcp.pop %v605
    %v607 = vmul.f32 1.0, %v606
    %v608 = vtanh.pop %v601
    %v609 = vmul.f32 %v607, %v430
    %611 = vrot.lane.b32.xlu0 %v608, 64
    %v612 = vpop.permute.xlu0 %611
    %v614 = vmul.f32 %v607, %v612
    %616 = vrot.lane.b32.xlu0 %v614, 32
    %v617 = vpop.permute.xlu0 %616
    %v619 = vadd.f32 %v609, %v617
    %v620 = vtanh.pop %v619
    %622 = vrot.lane.b32.xlu0 %v620, 64
    %v623 = vpop.permute.xlu0 %622
    %v625 = vmul.f32 %v607, %v623
    %627 = vrot.lane.b32.xlu0 %v625, 64
    %v628 = vpop.permute.xlu0 %627
    %vm630 = vcmask 523520
    %631 = vst.msk [vmem:[#allocation2] sm:$0xff] %vm630, %v628
    %632 = vmatprep.subr.bf16.mxu0 0
    %633 = vmatpush1.bf16.msra.mxu0 %v222
    %634 = vmatprep.subr.bf16.mxu0 0
    %635 = vmatpush1.bf16.msra.mxu0 %v223
    %636 = vmatprep.subr.bf16.mxu0 0
    %637 = vmatpush1.bf16.msra.mxu0 0
    %638 = vmatprep.subr.bf16.mxu0 0
    %639 = vmatpush1.bf16.msra.mxu0 0
    %640 = vmatprep.subr.bf16.mxu0 0
    %641 = vmatpush1.bf16.msra.mxu0 0
    %642 = vmatprep.subr.bf16.mxu0 0
    %643 = vmatpush1.bf16.msra.mxu0 0
    %644 = vmatprep.subr.bf16.mxu0 0
    %645 = vmatpush1.bf16.msra.mxu0 0
    %646 = vmatprep.subr.bf16.mxu0 0
    %647 = vmatpush1.bf16.msra.mxu0 0
    %648 = vmatprep.subr.bf16.mxu0 0
    %649 = vmatpush1.bf16.msra.mxu0 0
    %650 = vmatprep.subr.bf16.mxu0 0
    %651 = vmatpush1.bf16.msra.mxu0 0
    %652 = vmatprep.subr.bf16.mxu0 0
    %653 = vmatpush1.bf16.msra.mxu0 0
    %654 = vmatprep.subr.bf16.mxu0 0
    %655 = vmatpush1.bf16.msra.mxu0 0
    %656 = vmatprep.subr.bf16.mxu0 0
    %657 = vmatpush1.bf16.msra.mxu0 0
    %658 = vmatprep.subr.bf16.mxu0 0
    %659 = vmatpush1.bf16.msra.mxu0 0
    %660 = vmatprep.subr.bf16.mxu0 0
    %661 = vmatpush1.bf16.msra.mxu0 0
    %662 = vmatprep.subr.bf16.mxu0 0
    %663 = vmatpush1.bf16.msra.mxu0 0
    %664 = vmatprep.mubr.bf16.mxu0 0
    %665 = vmatmul.mubr.bf16.gmra.mrb[0].mxu0 %v512
    %v666 = vpop.f32.mrb[0].mxu0
    %v667 = vadd.f32 0.0, %v666
    %v668 = vpop.f32.mrb[0].mxu0
    %v669 = vpop.f32.mrb[0].mxu0
    %v670 = vpop.f32.mrb[0].mxu0
    %671 = vdwg.mxu0
    %v672 = vadd.f32 %v192, %v667
    %v673 = vxor.u32 %v672, 2147483648
    %v674 = vmul.f32 %v673, 1.442695
    %v675 = vpow.pop %v674
    %v676 = vadd.f32 %v675, 1.0
    %v677 = vrcp.pop %v676
    %v678 = vmul.f32 1.0, %v677
    %v679 = vtanh.pop %v672
    %v680 = vmul.f32 %v678, %v500
    %682 = vrot.lane.b32.xlu0 %v679, 64
    %v683 = vpop.permute.xlu0 %682
    %v685 = vmul.f32 %v678, %v683
    %687 = vrot.lane.b32.xlu0 %v685, 32
    %v688 = vpop.permute.xlu0 %687
    %v690 = vadd.f32 %v680, %v688
    %v691 = vtanh.pop %v690
    %693 = vrot.lane.b32.xlu0 %v691, 64
    %v694 = vpop.permute.xlu0 %693
    %v696 = vmul.f32 %v678, %v694
    %v697 = vpack.c.bf16 %v696, %v696
    %699 = vrot.lane.b32.xlu0 %v697, 32
    %v700 = vpop.permute.xlu0 %699
    %v702 = vsel %vm226, %v700, 0
    %704 = vmatprep.subr.bf16.mxu0 0
    %705 = vmatpush1.bf16.msra.mxu0 %v313
    %706 = vmatprep.subr.bf16.mxu0 0
    %707 = vmatpush1.bf16.msra.mxu0 %v314
    %708 = vmatprep.subr.bf16.mxu0 0
    %709 = vmatpush1.bf16.msra.mxu0 0
    %710 = vmatprep.subr.bf16.mxu0 0
    %711 = vmatpush1.bf16.msra.mxu0 0
    %712 = vmatprep.subr.bf16.mxu0 0
    %713 = vmatpush1.bf16.msra.mxu0 0
    %714 = vmatprep.subr.bf16.mxu0 0
    %715 = vmatpush1.bf16.msra.mxu0 0
    %716 = vmatprep.subr.bf16.mxu0 0
    %717 = vmatpush1.bf16.msra.mxu0 0
    %718 = vmatprep.subr.bf16.mxu0 0
    %719 = vmatpush1.bf16.msra.mxu0 0
    %720 = vmatprep.subr.bf16.mxu0 0
    %721 = vmatpush1.bf16.msra.mxu0 0
    %722 = vmatprep.subr.bf16.mxu0 0
    %723 = vmatpush1.bf16.msra.mxu0 0
    %724 = vmatprep.subr.bf16.mxu0 0
    %725 = vmatpush1.bf16.msra.mxu0 0
    %726 = vmatprep.subr.bf16.mxu0 0
    %727 = vmatpush1.bf16.msra.mxu0 0
    %728 = vmatprep.subr.bf16.mxu0 0
    %729 = vmatpush1.bf16.msra.mxu0 0
    %730 = vmatprep.subr.bf16.mxu0 0
    %731 = vmatpush1.bf16.msra.mxu0 0
    %732 = vmatprep.subr.bf16.mxu0 0
    %733 = vmatpush1.bf16.msra.mxu0 0
    %734 = vmatprep.subr.bf16.mxu0 0
    %735 = vmatpush1.bf16.msra.mxu0 0
    %736 = vmatprep.mubr.bf16.mxu0 0
    %737 = vmatmul.mubr.bf16.gmra.mrb[0].mxu0 %v702
    %v738 = vpop.f32.mrb[0].mxu0
    %v739 = vadd.f32 %v300, %v738
    %v740 = vpop.f32.mrb[0].mxu0
    %v741 = vpop.f32.mrb[0].mxu0
    %v742 = vpop.f32.mrb[0].mxu0
    %743 = vdwg.mxu0
    %v744 = vpack.c.bf16 %v625, %v625
    %746 = vrot.lane.b32.xlu0 %v744, 32
    %v747 = vpop.permute.xlu0 %746
    %v749 = vsel %vm226, %v747, 0
    %751 = vmatprep.subr.bf16.mxu0 0
    %752 = vmatpush1.bf16.msra.mxu0 %v368
    %753 = vmatprep.subr.bf16.mxu0 0
    %754 = vmatpush1.bf16.msra.mxu0 %v369
    %755 = vmatprep.subr.bf16.mxu0 0
    %756 = vmatpush1.bf16.msra.mxu0 0
    %757 = vmatprep.subr.bf16.mxu0 0
    %758 = vmatpush1.bf16.msra.mxu0 0
    %759 = vmatprep.subr.bf16.mxu0 0
    %760 = vmatpush1.bf16.msra.mxu0 0
    %761 = vmatprep.subr.bf16.mxu0 0
    %762 = vmatpush1.bf16.msra.mxu0 0
    %763 = vmatprep.subr.bf16.mxu0 0
    %764 = vmatpush1.bf16.msra.mxu0 0
    %765 = vmatprep.subr.bf16.mxu0 0
    %766 = vmatpush1.bf16.msra.mxu0 0
    %767 = vmatprep.subr.bf16.mxu0 0
    %768 = vmatpush1.bf16.msra.mxu0 0
    %769 = vmatprep.subr.bf16.mxu0 0
    %770 = vmatpush1.bf16.msra.mxu0 0
    %771 = vmatprep.subr.bf16.mxu0 0
    %772 = vmatpush1.bf16.msra.mxu0 0
    %773 = vmatprep.subr.bf16.mxu0 0
    %774 = vmatpush1.bf16.msra.mxu0 0
    %775 = vmatprep.subr.bf16.mxu0 0
    %776 = vmatpush1.bf16.msra.mxu0 0
    %777 = vmatprep.subr.bf16.mxu0 0
    %778 = vmatpush1.bf16.msra.mxu0 0
    %779 = vmatprep.subr.bf16.mxu0 0
    %780 = vmatpush1.bf16.msra.mxu0 0
    %781 = vmatprep.subr.bf16.mxu0 0
    %782 = vmatpush1.bf16.msra.mxu0 0
    %783 = vmatprep.mubr.bf16.mxu0 0
    %784 = vmatmul.mubr.bf16.gmra.mrb[0].mxu0 %v749
    %v785 = vpop.f32.mrb[0].mxu0
    %v786 = vadd.f32 0.0, %v785
    %v787 = vpop.f32.mrb[0].mxu0
    %v788 = vpop.f32.mrb[0].mxu0
    %v789 = vpop.f32.mrb[0].mxu0
    %790 = vdwg.mxu0
    %v791 = vadd.f32 %v739, %v786
    %v792 = vxor.u32 %v791, 2147483648
    %v793 = vmul.f32 %v792, 1.442695
    %v794 = vpow.pop %v793
    %v795 = vadd.f32 %v794, 1.0
    %v796 = vrcp.pop %v795
    %v797 = vmul.f32 1.0, %v796
    %v798 = vtanh.pop %v791
    %v799 = vmul.f32 %v797, %v619
    %801 = vrot.lane.b32.xlu0 %v798, 64
    %v802 = vpop.permute.xlu0 %801
    %v804 = vmul.f32 %v797, %v802
    %806 = vrot.lane.b32.xlu0 %v804, 32
    %v807 = vpop.permute.xlu0 %806
    %v809 = vadd.f32 %v799, %v807
    %v810 = vtanh.pop %v809
    %812 = vrot.lane.b32.xlu0 %v810, 64
    %v813 = vpop.permute.xlu0 %812
    %v815 = vmul.f32 %v797, %v813
    %817 = vrot.lane.b32.xlu0 %v815, 96
    %v818 = vpop.permute.xlu0 %817
    %vm820 = vcmask 785920
    %821 = vst.msk [vmem:[#allocation2] sm:$0xff] %vm820, %v818
    %822 = vmatprep.subr.bf16.mxu0 0
    %823 = vmatpush1.bf16.msra.mxu0 %v222
    %824 = vmatprep.subr.bf16.mxu0 0
    %825 = vmatpush1.bf16.msra.mxu0 %v223
    %826 = vmatprep.subr.bf16.mxu0 0
    %827 = vmatpush1.bf16.msra.mxu0 0
    %828 = vmatprep.subr.bf16.mxu0 0
    %829 = vmatpush1.bf16.msra.mxu0 0
    %830 = vmatprep.subr.bf16.mxu0 0
    %831 = vmatpush1.bf16.msra.mxu0 0
    %832 = vmatprep.subr.bf16.mxu0 0
    %833 = vmatpush1.bf16.msra.mxu0 0
    %834 = vmatprep.subr.bf16.mxu0 0
    %835 = vmatpush1.bf16.msra.mxu0 0
    %836 = vmatprep.subr.bf16.mxu0 0
    %837 = vmatpush1.bf16.msra.mxu0 0
    %838 = vmatprep.subr.bf16.mxu0 0
    %839 = vmatpush1.bf16.msra.mxu0 0
    %840 = vmatprep.subr.bf16.mxu0 0
    %841 = vmatpush1.bf16.msra.mxu0 0
    %842 = vmatprep.subr.bf16.mxu0 0
    %843 = vmatpush1.bf16.msra.mxu0 0
    %844 = vmatprep.subr.bf16.mxu0 0
    %845 = vmatpush1.bf16.msra.mxu0 0
    %846 = vmatprep.subr.bf16.mxu0 0
    %847 = vmatpush1.bf16.msra.mxu0 0
    %848 = vmatprep.subr.bf16.mxu0 0
    %849 = vmatpush1.bf16.msra.mxu0 0
    %850 = vmatprep.subr.bf16.mxu0 0
    %851 = vmatpush1.bf16.msra.mxu0 0
    %852 = vmatprep.subr.bf16.mxu0 0
    %853 = vmatpush1.bf16.msra.mxu0 0
    %854 = vmatprep.mubr.bf16.mxu0 0
    %855 = vmatmul.mubr.bf16.gmra.mrb[0].mxu0 %v702
    %v856 = vpop.f32.mrb[0].mxu0
    %v857 = vadd.f32 0.0, %v856
    %v858 = vpop.f32.mrb[0].mxu0
    %v859 = vpop.f32.mrb[0].mxu0
    %v860 = vpop.f32.mrb[0].mxu0
    %861 = vdwg.mxu0
    %v862 = vadd.f32 %v195, %v857
    %v863 = vxor.u32 %v862, 2147483648
    %v864 = vmul.f32 %v863, 1.442695
    %v865 = vpow.pop %v864
    %v866 = vadd.f32 %v865, 1.0
    %v867 = vrcp.pop %v866
    %v868 = vmul.f32 1.0, %v867
    %v869 = vtanh.pop %v862
    %v870 = vmul.f32 %v868, %v690
    %872 = vrot.lane.b32.xlu0 %v869, 64
    %v873 = vpop.permute.xlu0 %872
    %v875 = vmul.f32 %v868, %v873
    %877 = vrot.lane.b32.xlu0 %v875, 32
    %v878 = vpop.permute.xlu0 %877
    %v880 = vadd.f32 %v870, %v878
    %v881 = vtanh.pop %v880
    %883 = vrot.lane.b32.xlu0 %v881, 64
    %v884 = vpop.permute.xlu0 %883
    %v886 = vmul.f32 %v868, %v884
    %v887 = vpack.c.bf16 %v886, %v886
    %889 = vrot.lane.b32.xlu0 %v887, 32
    %v890 = vpop.permute.xlu0 %889
    %v892 = vsel %vm226, %v890, 0
    %894 = vmatprep.subr.bf16.mxu0 0
    %895 = vmatpush1.bf16.msra.mxu0 %v313
    %896 = vmatprep.subr.bf16.mxu0 0
    %897 = vmatpush1.bf16.msra.mxu0 %v314
    %898 = vmatprep.subr.bf16.mxu0 0
    %899 = vmatpush1.bf16.msra.mxu0 0
    %900 = vmatprep.subr.bf16.mxu0 0
    %901 = vmatpush1.bf16.msra.mxu0 0
    %902 = vmatprep.subr.bf16.mxu0 0
    %903 = vmatpush1.bf16.msra.mxu0 0
    %904 = vmatprep.subr.bf16.mxu0 0
    %905 = vmatpush1.bf16.msra.mxu0 0
    %906 = vmatprep.subr.bf16.mxu0 0
    %907 = vmatpush1.bf16.msra.mxu0 0
    %908 = vmatprep.subr.bf16.mxu0 0
    %909 = vmatpush1.bf16.msra.mxu0 0
    %910 = vmatprep.subr.bf16.mxu0 0
    %911 = vmatpush1.bf16.msra.mxu0 0
    %912 = vmatprep.subr.bf16.mxu0 0
    %913 = vmatpush1.bf16.msra.mxu0 0
    %914 = vmatprep.subr.bf16.mxu0 0
    %915 = vmatpush1.bf16.msra.mxu0 0
    %916 = vmatprep.subr.bf16.mxu0 0
    %917 = vmatpush1.bf16.msra.mxu0 0
    %918 = vmatprep.subr.bf16.mxu0 0
    %919 = vmatpush1.bf16.msra.mxu0 0
    %920 = vmatprep.subr.bf16.mxu0 0
    %921 = vmatpush1.bf16.msra.mxu0 0
    %922 = vmatprep.subr.bf16.mxu0 0
    %923 = vmatpush1.bf16.msra.mxu0 0
    %924 = vmatprep.subr.bf16.mxu0 0
    %925 = vmatpush1.bf16.msra.mxu0 0
    %926 = vmatprep.mubr.bf16.mxu0 0
    %927 = vmatmul.mubr.bf16.gmra.mrb[0].mxu0 %v892
    %v928 = vpop.f32.mrb[0].mxu0
    %v929 = vadd.f32 %v300, %v928
    %v930 = vpop.f32.mrb[0].mxu0
    %v931 = vpop.f32.mrb[0].mxu0
    %v932 = vpop.f32.mrb[0].mxu0
    %933 = vdwg.mxu0
    %v934 = vpack.c.bf16 %v815, %v815
    %936 = vrot.lane.b32.xlu0 %v934, 32
    %v937 = vpop.permute.xlu0 %936
    %v939 = vsel %vm226, %v937, 0
    %941 = vmatprep.subr.bf16.mxu0 0
    %942 = vmatpush1.bf16.msra.mxu0 %v368
    %943 = vmatprep.subr.bf16.mxu0 0
    %944 = vmatpush1.bf16.msra.mxu0 %v369
    %945 = vmatprep.subr.bf16.mxu0 0
    %946 = vmatpush1.bf16.msra.mxu0 0
    %947 = vmatprep.subr.bf16.mxu0 0
    %948 = vmatpush1.bf16.msra.mxu0 0
    %949 = vmatprep.subr.bf16.mxu0 0
    %950 = vmatpush1.bf16.msra.mxu0 0
    %951 = vmatprep.subr.bf16.mxu0 0
    %952 = vmatpush1.bf16.msra.mxu0 0
    %953 = vmatprep.subr.bf16.mxu0 0
    %954 = vmatpush1.bf16.msra.mxu0 0
    %955 = vmatprep.subr.bf16.mxu0 0
    %956 = vmatpush1.bf16.msra.mxu0 0
    %957 = vmatprep.subr.bf16.mxu0 0
    %958 = vmatpush1.bf16.msra.mxu0 0
    %959 = vmatprep.subr.bf16.mxu0 0
    %960 = vmatpush1.bf16.msra.mxu0 0
    %961 = vmatprep.subr.bf16.mxu0 0
    %962 = vmatpush1.bf16.msra.mxu0 0
    %963 = vmatprep.subr.bf16.mxu0 0
    %964 = vmatpush1.bf16.msra.mxu0 0
    %965 = vmatprep.subr.bf16.mxu0 0
    %966 = vmatpush1.bf16.msra.mxu0 0
    %967 = vmatprep.subr.bf16.mxu0 0
    %968 = vmatpush1.bf16.msra.mxu0 0
    %969 = vmatprep.subr.bf16.mxu0 0
    %970 = vmatpush1.bf16.msra.mxu0 0
    %971 = vmatprep.subr.bf16.mxu0 0
    %972 = vmatpush1.bf16.msra.mxu0 0
    %973 = vmatprep.mubr.bf16.mxu0 0
    %974 = vmatmul.mubr.bf16.gmra.mrb[0].mxu0 %v939
    %v975 = vpop.f32.mrb[0].mxu0
    %v976 = vadd.f32 0.0, %v975
    %v977 = vpop.f32.mrb[0].mxu0
    %v978 = vpop.f32.mrb[0].mxu0
    %v979 = vpop.f32.mrb[0].mxu0
    %980 = vdwg.mxu0
    %v981 = vadd.f32 %v929, %v976
    %v982 = vxor.u32 %v981, 2147483648
    %v983 = vmul.f32 %v982, 1.442695
    %v984 = vpow.pop %v983
    %v985 = vadd.f32 %v984, 1.0
    %v986 = vrcp.pop %v985
    %v987 = vmul.f32 1.0, %v986
    %v988 = vtanh.pop %v981
    %v989 = vmul.f32 %v987, %v809
    %991 = vrot.lane.b32.xlu0 %v988, 64
    %v992 = vpop.permute.xlu0 %991
    %v994 = vmul.f32 %v987, %v992
    %996 = vrot.lane.b32.xlu0 %v994, 32
    %v997 = vpop.permute.xlu0 %996
    %v999 = vadd.f32 %v989, %v997
    %v1000 = vtanh.pop %v999
    %1002 = vrot.lane.b32.xlu0 %v1000, 64
    %v1003 = vpop.permute.xlu0 %1002
    %v1005 = vmul.f32 %v987, %v1003
    %vm1006 = vcmask 1048320
    %1007 = vst.msk [vmem:[#allocation2] sm:$0xff] %vm1006, %v1005
    %1008 = vmatprep.subr.bf16.mxu0 0
    %1009 = vmatpush1.bf16.msra.mxu0 %v222
    %1010 = vmatprep.subr.bf16.mxu0 0
    %1011 = vmatpush1.bf16.msra.mxu0 %v223
    %1012 = vmatprep.subr.bf16.mxu0 0
    %1013 = vmatpush1.bf16.msra.mxu0 0
    %1014 = vmatprep.subr.bf16.mxu0 0
    %1015 = vmatpush1.bf16.msra.mxu0 0
    %1016 = vmatprep.subr.bf16.mxu0 0
    %1017 = vmatpush1.bf16.msra.mxu0 0
    %1018 = vmatprep.subr.bf16.mxu0 0
    %1019 = vmatpush1.bf16.msra.mxu0 0
    %1020 = vmatprep.subr.bf16.mxu0 0
    %1021 = vmatpush1.bf16.msra.mxu0 0
    %1022 = vmatprep.subr.bf16.mxu0 0
    %1023 = vmatpush1.bf16.msra.mxu0 0
    %1024 = vmatprep.subr.bf16.mxu0 0
    %1025 = vmatpush1.bf16.msra.mxu0 0
    %1026 = vmatprep.subr.bf16.mxu0 0
    %1027 = vmatpush1.bf16.msra.mxu0 0
    %1028 = vmatprep.subr.bf16.mxu0 0
    %1029 = vmatpush1.bf16.msra.mxu0 0
    %1030 = vmatprep.subr.bf16.mxu0 0
    %1031 = vmatpush1.bf16.msra.mxu0 0
    %1032 = vmatprep.subr.bf16.mxu0 0
    %1033 = vmatpush1.bf16.msra.mxu0 0
    %1034 = vmatprep.subr.bf16.mxu0 0
    %1035 = vmatpush1.bf16.msra.mxu0 0
    %1036 = vmatprep.subr.bf16.mxu0 0
    %1037 = vmatpush1.bf16.msra.mxu0 0
    %1038 = vmatprep.subr.bf16.mxu0 0
    %1039 = vmatpush1.bf16.msra.mxu0 0
    %1040 = vmatprep.mubr.bf16.mxu0 0
    %1041 = vmatmul.mubr.bf16.gmra.mrb[0].mxu0 %v892
    %v1042 = vpop.f32.mrb[0].mxu0
    %v1043 = vadd.f32 0.0, %v1042
    %v1044 = vpop.f32.mrb[0].mxu0
    %v1045 = vpop.f32.mrb[0].mxu0
    %v1046 = vpop.f32.mrb[0].mxu0
    %1047 = vdwg.mxu0
    %v1048 = vadd.f32 %v200, %v1043
    %v1049 = vxor.u32 %v1048, 2147483648
    %v1050 = vmul.f32 %v1049, 1.442695
    %v1051 = vpow.pop %v1050
    %v1052 = vadd.f32 %v1051, 1.0
    %v1053 = vrcp.pop %v1052
    %v1054 = vmul.f32 1.0, %v1053
    %v1055 = vtanh.pop %v1048
    %v1056 = vmul.f32 %v1054, %v880
    %1058 = vrot.lane.b32.xlu0 %v1055, 64
    %v1059 = vpop.permute.xlu0 %1058
    %v1061 = vmul.f32 %v1054, %v1059
    %1063 = vrot.lane.b32.xlu0 %v1061, 32
    %v1064 = vpop.permute.xlu0 %1063
    %v1066 = vadd.f32 %v1056, %v1064
    %v1067 = vtanh.pop %v1066
    %1069 = vrot.lane.b32.xlu0 %v1067, 64
    %v1070 = vpop.permute.xlu0 %1069
    %v1072 = vmul.f32 %v1054, %v1070
    %v1073 = vpack.c.bf16 %v1072, %v1072
    %1075 = vrot.lane.b32.xlu0 %v1073, 32
    %v1076 = vpop.permute.xlu0 %1075
    %v1078 = vsel %vm226, %v1076, 0
    %1080 = vmatprep.subr.bf16.mxu0 0
    %1081 = vmatpush1.bf16.msra.mxu0 %v313
    %1082 = vmatprep.subr.bf16.mxu0 0
    %1083 = vmatpush1.bf16.msra.mxu0 %v314
    %1084 = vmatprep.subr.bf16.mxu0 0
    %1085 = vmatpush1.bf16.msra.mxu0 0
    %1086 = vmatprep.subr.bf16.mxu0 0
    %1087 = vmatpush1.bf16.msra.mxu0 0
    %1088 = vmatprep.subr.bf16.mxu0 0
    %1089 = vmatpush1.bf16.msra.mxu0 0
    %1090 = vmatprep.subr.bf16.mxu0 0
    %1091 = vmatpush1.bf16.msra.mxu0 0
    %1092 = vmatprep.subr.bf16.mxu0 0
    %1093 = vmatpush1.bf16.msra.mxu0 0
    %1094 = vmatprep.subr.bf16.mxu0 0
    %1095 = vmatpush1.bf16.msra.mxu0 0
    %1096 = vmatprep.subr.bf16.mxu0 0
    %1097 = vmatpush1.bf16.msra.mxu0 0
    %1098 = vmatprep.subr.bf16.mxu0 0
    %1099 = vmatpush1.bf16.msra.mxu0 0
    %1100 = vmatprep.subr.bf16.mxu0 0
    %1101 = vmatpush1.bf16.msra.mxu0 0
    %1102 = vmatprep.subr.bf16.mxu0 0
    %1103 = vmatpush1.bf16.msra.mxu0 0
    %1104 = vmatprep.subr.bf16.mxu0 0
    %1105 = vmatpush1.bf16.msra.mxu0 0
    %1106 = vmatprep.subr.bf16.mxu0 0
    %1107 = vmatpush1.bf16.msra.mxu0 0
    %1108 = vmatprep.subr.bf16.mxu0 0
    %1109 = vmatpush1.bf16.msra.mxu0 0
    %1110 = vmatprep.subr.bf16.mxu0 0
    %1111 = vmatpush1.bf16.msra.mxu0 0
    %1112 = vmatprep.mubr.bf16.mxu0 0
    %1113 = vmatmul.mubr.bf16.gmra.mrb[0].mxu0 %v1078
    %v1114 = vpop.f32.mrb[0].mxu0
    %v1115 = vadd.f32 %v300, %v1114
    %v1116 = vpop.f32.mrb[0].mxu0
    %v1117 = vpop.f32.mrb[0].mxu0
    %v1118 = vpop.f32.mrb[0].mxu0
    %1119 = vdwg.mxu0
    %v1120 = vpack.c.bf16 %v1005, %v1005
    %1122 = vrot.lane.b32.xlu0 %v1120, 32
    %v1123 = vpop.permute.xlu0 %1122
    %v1125 = vsel %vm226, %v1123, 0
    %1127 = vmatprep.subr.bf16.mxu0 0
    %1128 = vmatpush1.bf16.msra.mxu0 %v368
    %1129 = vmatprep.subr.bf16.mxu0 0
    %1130 = vmatpush1.bf16.msra.mxu0 %v369
    %1131 = vmatprep.subr.bf16.mxu0 0
    %1132 = vmatpush1.bf16.msra.mxu0 0
    %1133 = vmatprep.subr.bf16.mxu0 0
    %1134 = vmatpush1.bf16.msra.mxu0 0
    %1135 = vmatprep.subr.bf16.mxu0 0
    %1136 = vmatpush1.bf16.msra.mxu0 0
    %1137 = vmatprep.subr.bf16.mxu0 0
    %1138 = vmatpush1.bf16.msra.mxu0 0
    %1139 = vmatprep.subr.bf16.mxu0 0
    %1140 = vmatpush1.bf16.msra.mxu0 0
    %1141 = vmatprep.subr.bf16.mxu0 0
    %1142 = vmatpush1.bf16.msra.mxu0 0
    %1143 = vmatprep.subr.bf16.mxu0 0
    %1144 = vmatpush1.bf16.msra.mxu0 0
    %1145 = vmatprep.subr.bf16.mxu0 0
    %1146 = vmatpush1.bf16.msra.mxu0 0
    %1147 = vmatprep.subr.bf16.mxu0 0
    %1148 = vmatpush1.bf16.msra.mxu0 0
    %1149 = vmatprep.subr.bf16.mxu0 0
    %1150 = vmatpush1.bf16.msra.mxu0 0
    %1151 = vmatprep.subr.bf16.mxu0 0
    %1152 = vmatpush1.bf16.msra.mxu0 0
    %1153 = vmatprep.subr.bf16.mxu0 0
    %1154 = vmatpush1.bf16.msra.mxu0 0
    %1155 = vmatprep.subr.bf16.mxu0 0
    %1156 = vmatpush1.bf16.msra.mxu0 0
    %1157 = vmatprep.subr.bf16.mxu0 0
    %1158 = vmatpush1.bf16.msra.mxu0 0
    %1159 = vmatprep.mubr.bf16.mxu0 0
    %1160 = vmatmul.mubr.bf16.gmra.mrb[0].mxu0 %v1125
    %v1161 = vpop.f32.mrb[0].mxu0
    %v1162 = vadd.f32 0.0, %v1161
    %v1163 = vpop.f32.mrb[0].mxu0
    %v1164 = vpop.f32.mrb[0].mxu0
    %v1165 = vpop.f32.mrb[0].mxu0
    %1166 = vdwg.mxu0
    %v1167 = vadd.f32 %v1115, %v1162
    %v1168 = vxor.u32 %v1167, 2147483648
    %v1169 = vmul.f32 %v1168, 1.442695
    %v1170 = vpow.pop %v1169
    %v1171 = vadd.f32 %v1170, 1.0
    %v1172 = vrcp.pop %v1171
    %v1173 = vmul.f32 1.0, %v1172
    %v1174 = vtanh.pop %v1167
    %v1175 = vmul.f32 %v1173, %v999
    %1177 = vrot.lane.b32.xlu0 %v1174, 64
    %v1178 = vpop.permute.xlu0 %1177
    %v1180 = vmul.f32 %v1173, %v1178
    %1182 = vrot.lane.b32.xlu0 %v1180, 32
    %v1183 = vpop.permute.xlu0 %1182
    %v1185 = vadd.f32 %v1175, %v1183
    %v1186 = vtanh.pop %v1185
    %1188 = vrot.lane.b32.xlu0 %v1186, 64
    %v1189 = vpop.permute.xlu0 %1188
    %v1191 = vmul.f32 %v1173, %v1189
    %1193 = vrot.lane.b32.xlu0 %v1191, 32
    %v1194 = vpop.permute.xlu0 %1193
    %1196 = vst.msk [vmem:[#allocation2 + $0x8] sm:$0xff] %vm226, %v1194
    %1197 = vmatprep.subr.bf16.mxu0 0
    %1198 = vmatpush1.bf16.msra.mxu0 %v222
    %1199 = vmatprep.subr.bf16.mxu0 0
    %1200 = vmatpush1.bf16.msra.mxu0 %v223
    %1201 = vmatprep.subr.bf16.mxu0 0
    %1202 = vmatpush1.bf16.msra.mxu0 0
    %1203 = vmatprep.subr.bf16.mxu0 0
    %1204 = vmatpush1.bf16.msra.mxu0 0
    %1205 = vmatprep.subr.bf16.mxu0 0
    %1206 = vmatpush1.bf16.msra.mxu0 0
    %1207 = vmatprep.subr.bf16.mxu0 0
    %1208 = vmatpush1.bf16.msra.mxu0 0
    %1209 = vmatprep.subr.bf16.mxu0 0
    %1210 = vmatpush1.bf16.msra.mxu0 0
    %1211 = vmatprep.subr.bf16.mxu0 0
    %1212 = vmatpush1.bf16.msra.mxu0 0
    %1213 = vmatprep.subr.bf16.mxu0 0
    %1214 = vmatpush1.bf16.msra.mxu0 0
    %1215 = vmatprep.subr.bf16.mxu0 0
    %1216 = vmatpush1.bf16.msra.mxu0 0
    %1217 = vmatprep.subr.bf16.mxu0 0
    %1218 = vmatpush1.bf16.msra.mxu0 0
    %1219 = vmatprep.subr.bf16.mxu0 0
    %1220 = vmatpush1.bf16.msra.mxu0 0
    %1221 = vmatprep.subr.bf16.mxu0 0
    %1222 = vmatpush1.bf16.msra.mxu0 0
    %1223 = vmatprep.subr.bf16.mxu0 0
    %1224 = vmatpush1.bf16.msra.mxu0 0
    %1225 = vmatprep.subr.bf16.mxu0 0
    %1226 = vmatpush1.bf16.msra.mxu0 0
    %1227 = vmatprep.subr.bf16.mxu0 0
    %1228 = vmatpush1.bf16.msra.mxu0 0
    %1229 = vmatprep.mubr.bf16.mxu0 0
    %1230 = vmatmul.mubr.bf16.gmra.mrb[0].mxu0 %v1078
    %v1231 = vpop.f32.mrb[0].mxu0
    %v1232 = vadd.f32 0.0, %v1231
    %v1233 = vpop.f32.mrb[0].mxu0
    %v1234 = vpop.f32.mrb[0].mxu0
    %v1235 = vpop.f32.mrb[0].mxu0
    %1236 = vdwg.mxu0
    %v1237 = vadd.f32 %v203, %v1232
    %v1238 = vxor.u32 %v1237, 2147483648
    %v1239 = vmul.f32 %v1238, 1.442695
    %v1240 = vpow.pop %v1239
    %v1241 = vadd.f32 %v1240, 1.0
    %v1242 = vrcp.pop %v1241
    %v1243 = vmul.f32 1.0, %v1242
    %v1244 = vtanh.pop %v1237
    %v1245 = vmul.f32 %v1243, %v1066
    %1247 = vrot.lane.b32.xlu0 %v1244, 64
    %v1248 = vpop.permute.xlu0 %1247
    %v1250 = vmul.f32 %v1243, %v1248
    %1252 = vrot.lane.b32.xlu0 %v1250, 32
    %v1253 = vpop.permute.xlu0 %1252
    %v1255 = vadd.f32 %v1245, %v1253
    %v1256 = vtanh.pop %v1255
    %1258 = vrot.lane.b32.xlu0 %v1256, 64
    %v1259 = vpop.permute.xlu0 %1258
    %v1261 = vmul.f32 %v1243, %v1259
    %v1262 = vpack.c.bf16 %v1261, %v1261
    %1264 = vrot.lane.b32.xlu0 %v1262, 32
    %v1265 = vpop.permute.xlu0 %1264
    %v1267 = vsel %vm226, %v1265, 0
    %1269 = vmatprep.subr.bf16.mxu0 0
    %1270 = vmatpush1.bf16.msra.mxu0 %v313
    %1271 = vmatprep.subr.bf16.mxu0 0
    %1272 = vmatpush1.bf16.msra.mxu0 %v314
    %1273 = vmatprep.subr.bf16.mxu0 0
    %1274 = vmatpush1.bf16.msra.mxu0 0
    %1275 = vmatprep.subr.bf16.mxu0 0
    %1276 = vmatpush1.bf16.msra.mxu0 0
    %1277 = vmatprep.subr.bf16.mxu0 0
    %1278 = vmatpush1.bf16.msra.mxu0 0
    %1279 = vmatprep.subr.bf16.mxu0 0
    %1280 = vmatpush1.bf16.msra.mxu0 0
    %1281 = vmatprep.subr.bf16.mxu0 0
    %1282 = vmatpush1.bf16.msra.mxu0 0
    %1283 = vmatprep.subr.bf16.mxu0 0
    %1284 = vmatpush1.bf16.msra.mxu0 0
    %1285 = vmatprep.subr.bf16.mxu0 0
    %1286 = vmatpush1.bf16.msra.mxu0 0
    %1287 = vmatprep.subr.bf16.mxu0 0
    %1288 = vmatpush1.bf16.msra.mxu0 0
    %1289 = vmatprep.subr.bf16.mxu0 0
    %1290 = vmatpush1.bf16.msra.mxu0 0
    %1291 = vmatprep.subr.bf16.mxu0 0
    %1292 = vmatpush1.bf16.msra.mxu0 0
    %1293 = vmatprep.subr.bf16.mxu0 0
    %1294 = vmatpush1.bf16.msra.mxu0 0
    %1295 = vmatprep.subr.bf16.mxu0 0
    %1296 = vmatpush1.bf16.msra.mxu0 0
    %1297 = vmatprep.subr.bf16.mxu0 0
    %1298 = vmatpush1.bf16.msra.mxu0 0
    %1299 = vmatprep.subr.bf16.mxu0 0
    %1300 = vmatpush1.bf16.msra.mxu0 0
    %1301 = vmatprep.mubr.bf16.mxu0 0
    %1302 = vmatmul.mubr.bf16.gmra.mrb[0].mxu0 %v1267
    %v1303 = vpop.f32.mrb[0].mxu0
    %v1304 = vadd.f32 %v300, %v1303
    %v1305 = vpop.f32.mrb[0].mxu0
    %v1306 = vpop.f32.mrb[0].mxu0
    %v1307 = vpop.f32.mrb[0].mxu0
    %1308 = vdwg.mxu0
    %v1309 = vpack.c.bf16 %v1191, %v1191
    %1311 = vrot.lane.b32.xlu0 %v1309, 32
    %v1312 = vpop.permute.xlu0 %1311
    %v1314 = vsel %vm226, %v1312, 0
    %1316 = vmatprep.subr.bf16.mxu0 0
    %1317 = vmatpush1.bf16.msra.mxu0 %v368
    %1318 = vmatprep.subr.bf16.mxu0 0
    %1319 = vmatpush1.bf16.msra.mxu0 %v369
    %1320 = vmatprep.subr.bf16.mxu0 0
    %1321 = vmatpush1.bf16.msra.mxu0 0
    %1322 = vmatprep.subr.bf16.mxu0 0
    %1323 = vmatpush1.bf16.msra.mxu0 0
    %1324 = vmatprep.subr.bf16.mxu0 0
    %1325 = vmatpush1.bf16.msra.mxu0 0
    %1326 = vmatprep.subr.bf16.mxu0 0
    %1327 = vmatpush1.bf16.msra.mxu0 0
    %1328 = vmatprep.subr.bf16.mxu0 0
    %1329 = vmatpush1.bf16.msra.mxu0 0
    %1330 = vmatprep.subr.bf16.mxu0 0
    %1331 = vmatpush1.bf16.msra.mxu0 0
    %1332 = vmatprep.subr.bf16.mxu0 0
    %1333 = vmatpush1.bf16.msra.mxu0 0
    %1334 = vmatprep.subr.bf16.mxu0 0
    %1335 = vmatpush1.bf16.msra.mxu0 0
    %1336 = vmatprep.subr.bf16.mxu0 0
    %1337 = vmatpush1.bf16.msra.mxu0 0
    %1338 = vmatprep.subr.bf16.mxu0 0
    %1339 = vmatpush1.bf16.msra.mxu0 0
    %1340 = vmatprep.subr.bf16.mxu0 0
    %1341 = vmatpush1.bf16.msra.mxu0 0
    %1342 = vmatprep.subr.bf16.mxu0 0
    %1343 = vmatpush1.bf16.msra.mxu0 0
    %1344 = vmatprep.subr.bf16.mxu0 0
    %1345 = vmatpush1.bf16.msra.mxu0 0
    %1346 = vmatprep.subr.bf16.mxu0 0
    %1347 = vmatpush1.bf16.msra.mxu0 0
    %1348 = vmatprep.mubr.bf16.mxu0 0
    %1349 = vmatmul.mubr.bf16.gmra.mrb[0].mxu0 %v1314
    %v1350 = vpop.f32.mrb[0].mxu0
    %v1351 = vadd.f32 0.0, %v1350
    %v1352 = vpop.f32.mrb[0].mxu0
    %v1353 = vpop.f32.mrb[0].mxu0
    %v1354 = vpop.f32.mrb[0].mxu0
    %1355 = vdwg.mxu0
    %v1356 = vadd.f32 %v1304, %v1351
    %v1357 = vxor.u32 %v1356, 2147483648
    %v1358 = vmul.f32 %v1357, 1.442695
    %v1359 = vpow.pop %v1358
    %v1360 = vadd.f32 %v1359, 1.0
    %v1361 = vrcp.pop %v1360
    %v1362 = vmul.f32 1.0, %v1361
    %v1363 = vtanh.pop %v1356
    %v1364 = vmul.f32 %v1362, %v1185
    %1366 = vrot.lane.b32.xlu0 %v1363, 64
    %v1367 = vpop.permute.xlu0 %1366
    %v1369 = vmul.f32 %v1362, %v1367
    %1371 = vrot.lane.b32.xlu0 %v1369, 32
    %v1372 = vpop.permute.xlu0 %1371
    %v1374 = vadd.f32 %v1364, %v1372
    %v1375 = vtanh.pop %v1374
    %1377 = vrot.lane.b32.xlu0 %v1375, 64
    %v1378 = vpop.permute.xlu0 %1377
    %v1380 = vmul.f32 %v1362, %v1378
    %1382 = vrot.lane.b32.xlu0 %v1380, 64
    %v1383 = vpop.permute.xlu0 %1382
    %1385 = vst.msk [vmem:[#allocation2 + $0x8] sm:$0xff] %vm630, %v1383
    %1386 = vmatprep.subr.bf16.mxu0 0
    %1387 = vmatpush1.bf16.msra.mxu0 %v222
    %1388 = vmatprep.subr.bf16.mxu0 0
    %1389 = vmatpush1.bf16.msra.mxu0 %v223
    %1390 = vmatprep.subr.bf16.mxu0 0
    %1391 = vmatpush1.bf16.msra.mxu0 0
    %1392 = vmatprep.subr.bf16.mxu0 0
    %1393 = vmatpush1.bf16.msra.mxu0 0
    %1394 = vmatprep.subr.bf16.mxu0 0
    %1395 = vmatpush1.bf16.msra.mxu0 0
    %1396 = vmatprep.subr.bf16.mxu0 0
    %1397 = vmatpush1.bf16.msra.mxu0 0
    %1398 = vmatprep.subr.bf16.mxu0 0
    %1399 = vmatpush1.bf16.msra.mxu0 0
    %1400 = vmatprep.subr.bf16.mxu0 0
    %1401 = vmatpush1.bf16.msra.mxu0 0
    %1402 = vmatprep.subr.bf16.mxu0 0
    %1403 = vmatpush1.bf16.msra.mxu0 0
    %1404 = vmatprep.subr.bf16.mxu0 0
    %1405 = vmatpush1.bf16.msra.mxu0 0
    %1406 = vmatprep.subr.bf16.mxu0 0
    %1407 = vmatpush1.bf16.msra.mxu0 0
    %1408 = vmatprep.subr.bf16.mxu0 0
    %1409 = vmatpush1.bf16.msra.mxu0 0
    %1410 = vmatprep.subr.bf16.mxu0 0
    %1411 = vmatpush1.bf16.msra.mxu0 0
    %1412 = vmatprep.subr.bf16.mxu0 0
    %1413 = vmatpush1.bf16.msra.mxu0 0
    %1414 = vmatprep.subr.bf16.mxu0 0
    %1415 = vmatpush1.bf16.msra.mxu0 0
    %1416 = vmatprep.subr.bf16.mxu0 0
    %1417 = vmatpush1.bf16.msra.mxu0 0
    %1418 = vmatprep.mubr.bf16.mxu0 0
    %1419 = vmatmul.mubr.bf16.gmra.mrb[0].mxu0 %v1267
    %v1420 = vpop.f32.mrb[0].mxu0
    %v1421 = vadd.f32 0.0, %v1420
    %v1422 = vpop.f32.mrb[0].mxu0
    %v1423 = vpop.f32.mrb[0].mxu0
    %v1424 = vpop.f32.mrb[0].mxu0
    %1425 = vdwg.mxu0
    %v1426 = vadd.f32 %v208, %v1421
    %v1427 = vxor.u32 %v1426, 2147483648
    %v1428 = vmul.f32 %v1427, 1.442695
    %v1429 = vpow.pop %v1428
    %v1430 = vadd.f32 %v1429, 1.0
    %v1431 = vrcp.pop %v1430
    %v1432 = vmul.f32 1.0, %v1431
    %v1433 = vtanh.pop %v1426
    %v1434 = vmul.f32 %v1432, %v1255
    %1436 = vrot.lane.b32.xlu0 %v1433, 64
    %v1437 = vpop.permute.xlu0 %1436
    %v1439 = vmul.f32 %v1432, %v1437
    %1441 = vrot.lane.b32.xlu0 %v1439, 32
    %v1442 = vpop.permute.xlu0 %1441
    %v1444 = vadd.f32 %v1434, %v1442
    %v1445 = vtanh.pop %v1444
    %1447 = vrot.lane.b32.xlu0 %v1445, 64
    %v1448 = vpop.permute.xlu0 %1447
    %v1450 = vmul.f32 %v1432, %v1448
    %v1451 = vpack.c.bf16 %v1450, %v1450
    %1453 = vrot.lane.b32.xlu0 %v1451, 32
    %v1454 = vpop.permute.xlu0 %1453
    %v1456 = vsel %vm226, %v1454, 0
    %1458 = vmatprep.subr.bf16.mxu0 0
    %1459 = vmatpush1.bf16.msra.mxu0 %v313
    %1460 = vmatprep.subr.bf16.mxu0 0
    %1461 = vmatpush1.bf16.msra.mxu0 %v314
    %1462 = vmatprep.subr.bf16.mxu0 0
    %1463 = vmatpush1.bf16.msra.mxu0 0
    %1464 = vmatprep.subr.bf16.mxu0 0
    %1465 = vmatpush1.bf16.msra.mxu0 0
    %1466 = vmatprep.subr.bf16.mxu0 0
    %1467 = vmatpush1.bf16.msra.mxu0 0
    %1468 = vmatprep.subr.bf16.mxu0 0
    %1469 = vmatpush1.bf16.msra.mxu0 0
    %1470 = vmatprep.subr.bf16.mxu0 0
    %1471 = vmatpush1.bf16.msra.mxu0 0
    %1472 = vmatprep.subr.bf16.mxu0 0
    %1473 = vmatpush1.bf16.msra.mxu0 0
    %1474 = vmatprep.subr.bf16.mxu0 0
    %1475 = vmatpush1.bf16.msra.mxu0 0
    %1476 = vmatprep.subr.bf16.mxu0 0
    %1477 = vmatpush1.bf16.msra.mxu0 0
    %1478 = vmatprep.subr.bf16.mxu0 0
    %1479 = vmatpush1.bf16.msra.mxu0 0
    %1480 = vmatprep.subr.bf16.mxu0 0
    %1481 = vmatpush1.bf16.msra.mxu0 0
    %1482 = vmatprep.subr.bf16.mxu0 0
    %1483 = vmatpush1.bf16.msra.mxu0 0
    %1484 = vmatprep.subr.bf16.mxu0 0
    %1485 = vmatpush1.bf16.msra.mxu0 0
    %1486 = vmatprep.subr.bf16.mxu0 0
    %1487 = vmatpush1.bf16.msra.mxu0 0
    %1488 = vmatprep.subr.bf16.mxu0 0
    %1489 = vmatpush1.bf16.msra.mxu0 0
    %1490 = vmatprep.mubr.bf16.mxu0 0
    %1491 = vmatmul.mubr.bf16.gmra.mrb[0].mxu0 %v1456
    %v1492 = vpop.f32.mrb[0].mxu0
    %v1493 = vadd.f32 %v300, %v1492
    %v1494 = vpop.f32.mrb[0].mxu0
    %v1495 = vpop.f32.mrb[0].mxu0
    %v1496 = vpop.f32.mrb[0].mxu0
    %1497 = vdwg.mxu0
    %v1498 = vpack.c.bf16 %v1380, %v1380
    %1500 = vrot.lane.b32.xlu0 %v1498, 32
    %v1501 = vpop.permute.xlu0 %1500
    %v1503 = vsel %vm226, %v1501, 0
    %1505 = vmatprep.subr.bf16.mxu0 0
    %1506 = vmatpush1.bf16.msra.mxu0 %v368
    %1507 = vmatprep.subr.bf16.mxu0 0
    %1508 = vmatpush1.bf16.msra.mxu0 %v369
    %1509 = vmatprep.subr.bf16.mxu0 0
    %1510 = vmatpush1.bf16.msra.mxu0 0
    %1511 = vmatprep.subr.bf16.mxu0 0
    %1512 = vmatpush1.bf16.msra.mxu0 0
    %1513 = vmatprep.subr.bf16.mxu0 0
    %1514 = vmatpush1.bf16.msra.mxu0 0
    %1515 = vmatprep.subr.bf16.mxu0 0
    %1516 = vmatpush1.bf16.msra.mxu0 0
    %1517 = vmatprep.subr.bf16.mxu0 0
    %1518 = vmatpush1.bf16.msra.mxu0 0
    %1519 = vmatprep.subr.bf16.mxu0 0
    %1520 = vmatpush1.bf16.msra.mxu0 0
    %1521 = vmatprep.subr.bf16.mxu0 0
    %1522 = vmatpush1.bf16.msra.mxu0 0
    %1523 = vmatprep.subr.bf16.mxu0 0
    %1524 = vmatpush1.bf16.msra.mxu0 0
    %1525 = vmatprep.subr.bf16.mxu0 0
    %1526 = vmatpush1.bf16.msra.mxu0 0
    %1527 = vmatprep.subr.bf16.mxu0 0
    %1528 = vmatpush1.bf16.msra.mxu0 0
    %1529 = vmatprep.subr.bf16.mxu0 0
    %1530 = vmatpush1.bf16.msra.mxu0 0
    %1531 = vmatprep.subr.bf16.mxu0 0
    %1532 = vmatpush1.bf16.msra.mxu0 0
    %1533 = vmatprep.subr.bf16.mxu0 0
    %1534 = vmatpush1.bf16.msra.mxu0 0
    %1535 = vmatprep.subr.bf16.mxu0 0
    %1536 = vmatpush1.bf16.msra.mxu0 0
    %1537 = vmatprep.mubr.bf16.mxu0 0
    %1538 = vmatmul.mubr.bf16.gmra.mrb[0].mxu0 %v1503
    %v1539 = vpop.f32.mrb[0].mxu0
    %v1540 = vadd.f32 0.0, %v1539
    %v1541 = vpop.f32.mrb[0].mxu0
    %v1542 = vpop.f32.mrb[0].mxu0
    %v1543 = vpop.f32.mrb[0].mxu0
    %1544 = vdwg.mxu0
    %v1545 = vadd.f32 %v1493, %v1540
    %v1546 = vxor.u32 %v1545, 2147483648
    %v1547 = vmul.f32 %v1546, 1.442695
    %v1548 = vpow.pop %v1547
    %v1549 = vadd.f32 %v1548, 1.0
    %v1550 = vrcp.pop %v1549
    %v1551 = vmul.f32 1.0, %v1550
    %v1552 = vtanh.pop %v1545
    %v1553 = vmul.f32 %v1551, %v1374
    %1555 = vrot.lane.b32.xlu0 %v1552, 64
    %v1556 = vpop.permute.xlu0 %1555
    %v1558 = vmul.f32 %v1551, %v1556
    %1560 = vrot.lane.b32.xlu0 %v1558, 32
    %v1561 = vpop.permute.xlu0 %1560
    %v1563 = vadd.f32 %v1553, %v1561
    %v1564 = vtanh.pop %v1563
    %1566 = vrot.lane.b32.xlu0 %v1564, 64
    %v1567 = vpop.permute.xlu0 %1566
    %v1569 = vmul.f32 %v1551, %v1567
    %1571 = vrot.lane.b32.xlu0 %v1569, 96
    %v1572 = vpop.permute.xlu0 %1571
    %1574 = vst.msk [vmem:[#allocation2 + $0x8] sm:$0xff] %vm820, %v1572
    %1575 = vmatprep.subr.bf16.mxu0 0
    %1576 = vmatpush1.bf16.msra.mxu0 %v222
    %1577 = vmatprep.subr.bf16.mxu0 0
    %1578 = vmatpush1.bf16.msra.mxu0 %v223
    %1579 = vmatprep.subr.bf16.mxu0 0
    %1580 = vmatpush1.bf16.msra.mxu0 0
    %1581 = vmatprep.subr.bf16.mxu0 0
    %1582 = vmatpush1.bf16.msra.mxu0 0
    %1583 = vmatprep.subr.bf16.mxu0 0
    %1584 = vmatpush1.bf16.msra.mxu0 0
    %1585 = vmatprep.subr.bf16.mxu0 0
    %1586 = vmatpush1.bf16.msra.mxu0 0
    %1587 = vmatprep.subr.bf16.mxu0 0
    %1588 = vmatpush1.bf16.msra.mxu0 0
    %1589 = vmatprep.subr.bf16.mxu0 0
    %1590 = vmatpush1.bf16.msra.mxu0 0
    %1591 = vmatprep.subr.bf16.mxu0 0
    %1592 = vmatpush1.bf16.msra.mxu0 0
    %1593 = vmatprep.subr.bf16.mxu0 0
    %1594 = vmatpush1.bf16.msra.mxu0 0
    %1595 = vmatprep.subr.bf16.mxu0 0
    %1596 = vmatpush1.bf16.msra.mxu0 0
    %1597 = vmatprep.subr.bf16.mxu0 0
    %1598 = vmatpush1.bf16.msra.mxu0 0
    %1599 = vmatprep.subr.bf16.mxu0 0
    %1600 = vmatpush1.bf16.msra.mxu0 0
    %1601 = vmatprep.subr.bf16.mxu0 0
    %1602 = vmatpush1.bf16.msra.mxu0 0
    %1603 = vmatprep.subr.bf16.mxu0 0
    %1604 = vmatpush1.bf16.msra.mxu0 0
    %1605 = vmatprep.subr.bf16.mxu0 0
    %1606 = vmatpush1.bf16.msra.mxu0 0
    %1607 = vmatprep.mubr.bf16.mxu0 0
    %1608 = vmatmul.mubr.bf16.gmra.mrb[0].mxu0 %v1456
    %v1609 = vpop.f32.mrb[0].mxu0
    %v1610 = vadd.f32 0.0, %v1609
    %v1611 = vpop.f32.mrb[0].mxu0
    %v1612 = vpop.f32.mrb[0].mxu0
    %v1613 = vpop.f32.mrb[0].mxu0
    %1614 = vdwg.mxu0
    %v1615 = vadd.f32 %v211, %v1610
    %v1616 = vxor.u32 %v1615, 2147483648
    %v1617 = vmul.f32 %v1616, 1.442695
    %v1618 = vpow.pop %v1617
    %v1619 = vadd.f32 %v1618, 1.0
    %v1620 = vrcp.pop %v1619
    %v1621 = vmul.f32 1.0, %v1620
    %v1622 = vtanh.pop %v1615
    %v1623 = vmul.f32 %v1621, %v1444
    %1625 = vrot.lane.b32.xlu0 %v1622, 64
    %v1626 = vpop.permute.xlu0 %1625
    %v1628 = vmul.f32 %v1621, %v1626
    %1630 = vrot.lane.b32.xlu0 %v1628, 32
    %v1631 = vpop.permute.xlu0 %1630
    %v1633 = vadd.f32 %v1623, %v1631
    %v1634 = vtanh.pop %v1633
    %1636 = vrot.lane.b32.xlu0 %v1634, 64
    %v1637 = vpop.permute.xlu0 %1636
    %v1639 = vmul.f32 %v1621, %v1637
    %v1640 = vpack.c.bf16 %v1639, %v1639
    %1642 = vrot.lane.b32.xlu0 %v1640, 32
    %v1643 = vpop.permute.xlu0 %1642
    %v1645 = vsel %vm226, %v1643, 0
    %1647 = vmatprep.subr.bf16.mxu0 0
    %1648 = vmatpush1.bf16.msra.mxu0 %v313
    %1649 = vmatprep.subr.bf16.mxu0 0
    %1650 = vmatpush1.bf16.msra.mxu0 %v314
    %1651 = vmatprep.subr.bf16.mxu0 0
    %1652 = vmatpush1.bf16.msra.mxu0 0
    %1653 = vmatprep.subr.bf16.mxu0 0
    %1654 = vmatpush1.bf16.msra.mxu0 0
    %1655 = vmatprep.subr.bf16.mxu0 0
    %1656 = vmatpush1.bf16.msra.mxu0 0
    %1657 = vmatprep.subr.bf16.mxu0 0
    %1658 = vmatpush1.bf16.msra.mxu0 0
    %1659 = vmatprep.subr.bf16.mxu0 0
    %1660 = vmatpush1.bf16.msra.mxu0 0
    %1661 = vmatprep.subr.bf16.mxu0 0
    %1662 = vmatpush1.bf16.msra.mxu0 0
    %1663 = vmatprep.subr.bf16.mxu0 0
    %1664 = vmatpush1.bf16.msra.mxu0 0
    %1665 = vmatprep.subr.bf16.mxu0 0
    %1666 = vmatpush1.bf16.msra.mxu0 0
    %1667 = vmatprep.subr.bf16.mxu0 0
    %1668 = vmatpush1.bf16.msra.mxu0 0
    %1669 = vmatprep.subr.bf16.mxu0 0
    %1670 = vmatpush1.bf16.msra.mxu0 0
    %1671 = vmatprep.subr.bf16.mxu0 0
    %1672 = vmatpush1.bf16.msra.mxu0 0
    %1673 = vmatprep.subr.bf16.mxu0 0
    %1674 = vmatpush1.bf16.msra.mxu0 0
    %1675 = vmatprep.subr.bf16.mxu0 0
    %1676 = vmatpush1.bf16.msra.mxu0 0
    %1677 = vmatprep.subr.bf16.mxu0 0
    %1678 = vmatpush1.bf16.msra.mxu0 0
    %1679 = vmatprep.mubr.bf16.mxu0 0
    %1680 = vmatmul.mubr.bf16.gmra.mrb[0].mxu0 %v1645
    %v1681 = vpop.f32.mrb[0].mxu0
    %v1682 = vadd.f32 %v300, %v1681
    %v1683 = vpop.f32.mrb[0].mxu0
    %v1684 = vpop.f32.mrb[0].mxu0
    %v1685 = vpop.f32.mrb[0].mxu0
    %1686 = vdwg.mxu0
    %v1687 = vpack.c.bf16 %v1569, %v1569
    %1689 = vrot.lane.b32.xlu0 %v1687, 32
    %v1690 = vpop.permute.xlu0 %1689
    %v1692 = vsel %vm226, %v1690, 0
    %1694 = vmatprep.subr.bf16.mxu0 0
    %1695 = vmatpush1.bf16.msra.mxu0 %v368
    %1696 = vmatprep.subr.bf16.mxu0 0
    %1697 = vmatpush1.bf16.msra.mxu0 %v369
    %1698 = vmatprep.subr.bf16.mxu0 0
    %1699 = vmatpush1.bf16.msra.mxu0 0
    %1700 = vmatprep.subr.bf16.mxu0 0
    %1701 = vmatpush1.bf16.msra.mxu0 0
    %1702 = vmatprep.subr.bf16.mxu0 0
    %1703 = vmatpush1.bf16.msra.mxu0 0
    %1704 = vmatprep.subr.bf16.mxu0 0
    %1705 = vmatpush1.bf16.msra.mxu0 0
    %1706 = vmatprep.subr.bf16.mxu0 0
    %1707 = vmatpush1.bf16.msra.mxu0 0
    %1708 = vmatprep.subr.bf16.mxu0 0
    %1709 = vmatpush1.bf16.msra.mxu0 0
    %1710 = vmatprep.subr.bf16.mxu0 0
    %1711 = vmatpush1.bf16.msra.mxu0 0
    %1712 = vmatprep.subr.bf16.mxu0 0
    %1713 = vmatpush1.bf16.msra.mxu0 0
    %1714 = vmatprep.subr.bf16.mxu0 0
    %1715 = vmatpush1.bf16.msra.mxu0 0
    %1716 = vmatprep.subr.bf16.mxu0 0
    %1717 = vmatpush1.bf16.msra.mxu0 0
    %1718 = vmatprep.subr.bf16.mxu0 0
    %1719 = vmatpush1.bf16.msra.mxu0 0
    %1720 = vmatprep.subr.bf16.mxu0 0
    %1721 = vmatpush1.bf16.msra.mxu0 0
    %1722 = vmatprep.subr.bf16.mxu0 0
    %1723 = vmatpush1.bf16.msra.mxu0 0
    %1724 = vmatprep.subr.bf16.mxu0 0
    %1725 = vmatpush1.bf16.msra.mxu0 0
    %1726 = vmatprep.mubr.bf16.mxu0 0
    %1727 = vmatmul.mubr.bf16.gmra.mrb[0].mxu0 %v1692
    %v1728 = vpop.f32.mrb[0].mxu0
    %v1729 = vadd.f32 0.0, %v1728
    %v1730 = vpop.f32.mrb[0].mxu0
    %v1731 = vpop.f32.mrb[0].mxu0
    %v1732 = vpop.f32.mrb[0].mxu0
    %1733 = vdwg.mxu0
    %v1734 = vadd.f32 %v1682, %v1729
    %v1735 = vxor.u32 %v1734, 2147483648
    %v1736 = vmul.f32 %v1735, 1.442695
    %v1737 = vpow.pop %v1736
    %v1738 = vadd.f32 %v1737, 1.0
    %v1739 = vrcp.pop %v1738
    %v1740 = vmul.f32 1.0, %v1739
    %v1741 = vtanh.pop %v1734
    %v1742 = vmul.f32 %v1740, %v1563
    %1744 = vrot.lane.b32.xlu0 %v1741, 64
    %v1745 = vpop.permute.xlu0 %1744
    %v1747 = vmul.f32 %v1740, %v1745
    %1749 = vrot.lane.b32.xlu0 %v1747, 32
    %v1750 = vpop.permute.xlu0 %1749
    %v1752 = vadd.f32 %v1742, %v1750
    %v1753 = vtanh.pop %v1752
    %1755 = vrot.lane.b32.xlu0 %v1753, 64
    %v1756 = vpop.permute.xlu0 %1755
    %v1758 = vmul.f32 %v1740, %v1756
    %1759 = vst.msk [vmem:[#allocation2 + $0x8] sm:$0xff] %vm1006, %v1758
    %v1760 = vld [vmem:[#allocation2] sm:$0xff]
    %v1761 = vld [vmem:[#allocation2 + $0x8] sm:$0xff]
    %v1762 = vpack.c.bf16 %v1760, %v1760
    %v1763 = vpack.c.bf16 %v1761, %v1761
    %v1764 = vld [vmem:[%s7] sm:$0xf]
    %v1765 = vld [vmem:[%s7 + $0x4] sm:$0xf]
    %v1766 = vld [vmem:[%s7 + $0x8] sm:$0xf]
    %v1767 = vld [vmem:[%s7 + $0xc] sm:$0xf]
    %v1768 = vld [vmem:[%s7 + $0x10] sm:$0xf]
    %v1769 = vld [vmem:[%s7 + $0x14] sm:$0xf]
    %v1770 = vld [vmem:[%s7 + $0x18] sm:$0xf]
    %v1771 = vld [vmem:[%s7 + $0x1c] sm:$0xf]
    %v1772 = vld [vmem:[%s7 + $0x20] sm:$0xf]
    %v1773 = vld [vmem:[%s7 + $0x24] sm:$0xf]
    %v1774 = vld [vmem:[%s7 + $0x28] sm:$0xf]
    %v1775 = vld [vmem:[%s7 + $0x2c] sm:$0xf]
    %v1776 = vld [vmem:[%s7 + $0x30] sm:$0xf]
    %v1777 = vld [vmem:[%s7 + $0x34] sm:$0xf]
    %v1778 = vld [vmem:[%s7 + $0x38] sm:$0xf]
    %v1779 = vld [vmem:[%s7 + $0x3c] sm:$0xf]
    %v1780 = vld [vmem:[%s7 + $0x40] sm:$0xf]
    %v1781 = vld [vmem:[%s7 + $0x44] sm:$0xf]
    %v1782 = vld [vmem:[%s7 + $0x48] sm:$0xf]
    %v1783 = vld [vmem:[%s7 + $0x4c] sm:$0xf]
    %v1784 = vld [vmem:[%s7 + $0x50] sm:$0xf]
    %v1785 = vld [vmem:[%s7 + $0x54] sm:$0xf]
    %v1786 = vld [vmem:[%s7 + $0x58] sm:$0xf]
    %v1787 = vld [vmem:[%s7 + $0x5c] sm:$0xf]
    %v1788 = vld [vmem:[%s7 + $0x60] sm:$0xf]
    %v1789 = vld [vmem:[%s7 + $0x64] sm:$0xf]
    %v1790 = vld [vmem:[%s7 + $0x68] sm:$0xf]
    %v1791 = vld [vmem:[%s7 + $0x6c] sm:$0xf]
    %v1792 = vld [vmem:[%s7 + $0x70] sm:$0xf]
    %v1793 = vld [vmem:[%s7 + $0x74] sm:$0xf]
    %v1794 = vld [vmem:[%s7 + $0x78] sm:$0xf]
    %v1795 = vld [vmem:[%s7 + $0x7c] sm:$0xf]
    %v1796 = vld [vmem:[%s8] sm:$0x1]
    %v1798 = vlaneseq
    %v1799 = vshrl.u32 %v1798, 7
    %v1800 = vsub.s32 0, %v1799
    %v1801 = vrot.slane %v1796, %v1800
    %v1835 = vunpack.c.l.b16 %v1764
    %v1836 = vunpack.c.l.b16 %v1765
    %v1837 = vunpack.c.l.b16 %v1766
    %v1838 = vunpack.c.l.b16 %v1767
    %v1839 = vunpack.c.l.b16 %v1768
    %v1840 = vunpack.c.l.b16 %v1769
    %v1841 = vunpack.c.l.b16 %v1770
    %v1842 = vunpack.c.l.b16 %v1771
    %v1843 = vunpack.c.l.b16 %v1772
    %v1844 = vunpack.c.l.b16 %v1773
    %v1845 = vunpack.c.l.b16 %v1774
    %v1846 = vunpack.c.l.b16 %v1775
    %v1847 = vunpack.c.l.b16 %v1776
    %v1848 = vunpack.c.l.b16 %v1777
    %v1849 = vunpack.c.l.b16 %v1778
    %v1850 = vunpack.c.l.b16 %v1779
    %v1851 = vunpack.c.l.b16 %v1780
    %v1852 = vunpack.c.l.b16 %v1781
    %v1853 = vunpack.c.l.b16 %v1782
    %v1854 = vunpack.c.l.b16 %v1783
    %v1855 = vunpack.c.l.b16 %v1784
    %v1856 = vunpack.c.l.b16 %v1785
    %v1857 = vunpack.c.l.b16 %v1786
    %v1858 = vunpack.c.l.b16 %v1787
    %v1859 = vunpack.c.l.b16 %v1788
    %v1860 = vunpack.c.l.b16 %v1789
    %v1861 = vunpack.c.l.b16 %v1790
    %v1862 = vunpack.c.l.b16 %v1791
    %v1863 = vunpack.c.l.b16 %v1792
    %v1864 = vunpack.c.l.b16 %v1793
    %v1865 = vunpack.c.l.b16 %v1794
    %v1866 = vunpack.c.l.b16 %v1795
    %v1867 = vpack.c.b16 %v1836, %v1835
    %v1868 = vpack.c.b16 %v1838, %v1837
    %v1869 = vpack.c.b16 %v1840, %v1839
    %v1870 = vpack.c.b16 %v1842, %v1841
    %v1871 = vpack.c.b16 %v1844, %v1843
    %v1872 = vpack.c.b16 %v1846, %v1845
    %v1873 = vpack.c.b16 %v1848, %v1847
    %v1874 = vpack.c.b16 %v1850, %v1849
    %v1875 = vpack.c.b16 %v1852, %v1851
    %v1876 = vpack.c.b16 %v1854, %v1853
    %v1877 = vpack.c.b16 %v1856, %v1855
    %v1878 = vpack.c.b16 %v1858, %v1857
    %v1879 = vpack.c.b16 %v1860, %v1859
    %v1880 = vpack.c.b16 %v1862, %v1861
    %v1881 = vpack.c.b16 %v1864, %v1863
    %v1882 = vpack.c.b16 %v1866, %v1865
    %1899 = vmatprep.subr.bf16.mxu0 0
    %1900 = vmatpush1.bf16.msra.mxu0 %v1867
    %1901 = vmatprep.subr.bf16.mxu0 0
    %1902 = vmatpush1.bf16.msra.mxu0 %v1868
    %1903 = vmatprep.subr.bf16.mxu0 0
    %1904 = vmatpush1.bf16.msra.mxu0 %v1869
    %1905 = vmatprep.subr.bf16.mxu0 0
    %1906 = vmatpush1.bf16.msra.mxu0 %v1870
    %1907 = vmatprep.subr.bf16.mxu0 0
    %1908 = vmatpush1.bf16.msra.mxu0 %v1871
    %1909 = vmatprep.subr.bf16.mxu0 0
    %1910 = vmatpush1.bf16.msra.mxu0 %v1872
    %1911 = vmatprep.subr.bf16.mxu0 0
    %1912 = vmatpush1.bf16.msra.mxu0 %v1873
    %1913 = vmatprep.subr.bf16.mxu0 0
    %1914 = vmatpush1.bf16.msra.mxu0 %v1874
    %1915 = vmatprep.subr.bf16.mxu0 0
    %1916 = vmatpush1.bf16.msra.mxu0 %v1875
    %1917 = vmatprep.subr.bf16.mxu0 0
    %1918 = vmatpush1.bf16.msra.mxu0 %v1876
    %1919 = vmatprep.subr.bf16.mxu0 0
    %1920 = vmatpush1.bf16.msra.mxu0 %v1877
    %1921 = vmatprep.subr.bf16.mxu0 0
    %1922 = vmatpush1.bf16.msra.mxu0 %v1878
    %1923 = vmatprep.subr.bf16.mxu0 0
    %1924 = vmatpush1.bf16.msra.mxu0 %v1879
    %1925 = vmatprep.subr.bf16.mxu0 0
    %1926 = vmatpush1.bf16.msra.mxu0 %v1880
    %1927 = vmatprep.subr.bf16.mxu0 0
    %1928 = vmatpush1.bf16.msra.mxu0 %v1881
    %1929 = vmatprep.subr.bf16.mxu0 0
    %1930 = vmatpush1.bf16.msra.mxu0 %v1882
    %1931 = vmatprep.mubr.bf16.mxu0 %v1763
    %1932 = vmatmul.mubr.bf16.gmra.mrb[0].mxu0 %v1762
    %v1933 = vpop.f32.mrb[0].mxu0
    %v1934 = vadd.f32 %v1801, %v1933
    %v1935 = vpop.f32.mrb[0].mxu0
    %v1936 = vpop.f32.mrb[0].mxu0
    %v1937 = vpop.f32.mrb[0].mxu0
    %1938 = vdwg.mxu0
    %v1939 = vmul.f32 %v1934, 0.5
    %v1940 = vmul.f32 %v1939, 1.442695
    %v1941 = vpow.pop %v1940
    %v1942 = vld [vmem:[%s9] sm:$0xff]
    %1944 = vrot.lane.b32.xlu0 %v1942, 16
    %v1945 = vpop.permute.xlu0 %1944
    %v1947 = vmul.f32 %v1941, %v1945
    %1949 = vrot.lane.b32.xlu0 %v1947, 112
    %v1950 = vpop.permute.xlu0 %1949
    %v1952 = vadd.f32 %v1934, %v1950
    %vm1953 = vcmask 130048
    %1954 = vst.msk [vmem:[#allocation3] sm:$0xff] %vm1953, %v1952
    %v1955 = vmul.f32 %v1941, %v1941
    %v1956 = vmul.f32 %v1934, %v1934
    %1958 = vrot.lane.b32.xlu0 %v1956, 16
    %v1959 = vpop.permute.xlu0 %1958
    %v1961 = vadd.f32 %v1955, %v1959
    %v1962 = vsub.f32 %v1961, %v1939
    %v1963 = vsub.f32 %v1962, 0.5
    %1965 = vrot.lane.b32.xlu0 %v1963, 112
    %v1966 = vpop.permute.xlu0 %1965
    %v1968 = vsel %vm1953, %v1966, 0.0
    %1969 = vadd.xlane.f32.xlu0 %v1968
    %v1970 = vpop.xlane.xlu0 %1969
    %v1971 = vrot.slane %v1970, 4
    %v1972 = vadd.f32 %v1970, %v1971
    %v1973 = vrot.slane %v1972, 2
    %v1974 = vadd.f32 %v1972, %v1973
    %v1975 = vrot.slane %v1974, 1
    %v1976 = vadd.f32 %v1974, %v1975
    %s1977 = vtos %v1976
    %v1978 = vstv %s1977
    %vm1979 = vcmask 0
    %1980 = vst.msk [vmem:[#allocation5] sm:$0x1] %vm1979, %v1978
    // Predicated region
    $region42: #{tpu_custom_call.1} parent=1 // pred_check
      _
    $region43: #{tpu_custom_call.1} parent=1 // pred_check_branch
      %1982 = sbr.rel (0) target = $region45
    $region44: #{tpu_custom_call.1} parent=1 // pred_region
      %s1984 = ssub.s32 128, 128
      %1985 = vsyncadd [#allocation4], %s1984
      %s1987 = sshll.u32 [#allocation3], 4
      %s1988 = int_to_ptr.vmem [resolvable:$true] %s1987
      %1990 = dma.vmem_to_hbm [thread:$0]  %s1988, 128, %s10, [#allocation4]
    $region45: #{tpu_custom_call.1} parent=1 // pred_fallthru
      _
    // Predicated region
    $region46: #{tpu_custom_call.1} parent=1 // pred_check
      _
    $region47: #{tpu_custom_call.1} parent=1 // pred_check_branch
      %1992 = sbr.rel (0) target = $region49
    $region48: #{tpu_custom_call.1} parent=1 // pred_region
      %s1994 = ssub.s32 16, 16
      %1995 = vsyncadd [#allocation6], %s1994
      %s1997 = sshll.u32 [#allocation5], 4
      %s1998 = int_to_ptr.vmem [resolvable:$true] %s1997
      %2000 = dma.vmem_to_hbm [thread:$0]  %s1998, 16, %s11, [#allocation6]
    $region49: #{tpu_custom_call.1} parent=1 // pred_fallthru
      _
    // Predicated region
    $region50: #{tpu_custom_call.1} parent=1 // pred_check
      _
    $region51: #{tpu_custom_call.1} parent=1 // pred_check_branch
      %2002 = sbr.rel (0) target = $region53
    $region52: #{tpu_custom_call.1} parent=1 // pred_region
      %2003 = dma.done [#allocation4], 128
    $region53: #{tpu_custom_call.1} parent=1 // pred_fallthru
      _
    // Predicated region
    $region54: #{tpu_custom_call.1} parent=1 // pred_check
      _
    $region55: #{tpu_custom_call.1} parent=1 // pred_check_branch
      %2005 = sbr.rel (0) target = $region57
    $region56: #{tpu_custom_call.1} parent=1 // pred_region
      %2006 = dma.done [#allocation6], 16
    $region57: #{tpu_custom_call.1} parent=1 // pred_fallthru
      _
    %2007 = vsyncpa [#allocation4], 1
    %2008 = vsyncpa [#allocation6], 1

</llo_original>
